<compile_context>
chip_gen: v7x
topology: tpu7x:2x2x1
jax: 0.10.0
libtpu: 0.0.40
codegen_flags: <defaults>
</compile_context>

<pallas_src>
import math

import jax
import jax.numpy as jnp
from jax.experimental import pallas as pl
from jax.experimental.pallas import tpu as pltpu

_MASK_FILL = float(jnp.finfo(jnp.float32).min)
_STATS_LANES = 128


# ----------------------------------------------------------------------------- sizing
def _detect_vmem_bytes():
    """Per-core VMEM capacity; conservative fallback if the query is unavailable."""
    try:
        info = pltpu.get_tpu_info()
        v = getattr(info, "vmem_capacity_bytes", None)
        if v:
            return int(v)
    except Exception:
        pass
    try:
        kind = jax.devices()[0].device_kind.lower()
    except Exception:
        kind = ""
    for tag, nbytes in (("v2", 16 << 20), ("v3", 16 << 20), ("v4", 128 << 20),
                        ("v5", 128 << 20), ("v6", 128 << 20), ("v7", 64 << 20)):
        if tag in kind:
            return nbytes
    return 64 << 20  # unknown chip: assume v7x-sized VMEM (safe everywhere modern)


def _vmem_budgets():
    vmem = _detect_vmem_bytes()
    vmem_limit = min(int(vmem * 0.75), 96 << 20)    # scoped-VMEM limit handed to Mosaic
    tile_budget = min(int(vmem * 0.30), 44 << 20)   # what head-blocking may spend
    return vmem_limit, tile_budget


def _pick_tile(S, target, align):
    """Largest multiple of `align` that divides S and is <= target.  Returns S itself
    when S <= target (full-dim blocks are always legal); None if no tile exists."""
    if S <= target:
        return S
    t = (min(target, S) // align) * align
    while t >= align:
        if S % t == 0:
            return t
        t -= align
    return None


def _per_head_bytes(tq, tkv, D, itemsize, masked):
    b = 2 * (tq + 2 * tkv) * D * itemsize      # double-buffered q/k/v tiles
    b += 2 * tq * D * itemsize                 # double-buffered output tile
    b += tq * D * 4                            # f32 accumulator scratch
    b += tq * D * itemsize                     # pre-scaled q scratch
    b += 2 * tq * _STATS_LANES * 4             # lane-replicated m/l stats
    b += 3 * tq * tkv * 4                      # score / prob f32 temporaries
    if masked:
        b += 2 * tq * tkv                      # double-buffered int8 mask tile
    return b


def _pick_head_block(BH, div_base, per_head_bytes, budget, n_q_blocks):
    """Heads per grid step: fits the budget, divides div_base (H when a per-head mask
    is streamed, else B*H) and keeps >=2 steps on the parallel axes (v7x dual-TC)."""
    hb = max(1, min(div_base, budget // max(per_head_bytes, 1)))
    while div_base % hb:
        hb -= 1
    while hb > 1 and (BH // hb) * n_q_blocks < 2:
        hb -= 1
        while hb > 1 and div_base % hb:
            hb -= 1
    return hb


# ----------------------------------------------------------------------------- kernel
def _make_kernel(inv_scale, mask_mode, mm_dtype):
    """mask_mode in {'none','shared','per_batch','per_head','full'} (trace-time)."""

    def kernel(*args):
        if mask_mode == "none":
            q_ref, k_ref, v_ref, o_ref, m_sc, l_sc, acc_sc, qs_sc = args
            mref = None
        else:
            q_ref, k_ref, v_ref, mref, o_ref, m_sc, l_sc, acc_sc, qs_sc = args

        kv = pl.program_id(2)

        @pl.when(kv == 0)
        def _():
            m_sc[...] = jnp.full_like(m_sc, -jnp.inf)
            l_sc[...] = jnp.zeros_like(l_sc)
            acc_sc[...] = jnp.zeros_like(acc_sc)
            # 1/scale folded into q once per q tile (hoisted out of the kv loop).
            qs_sc[...] = (q_ref[...] * inv_scale).astype(qs_sc.dtype)

        # scores = (q/scale) K^T with f32 accumulation, no explicit transpose.
        s = jnp.einsum("bqd,bkd->bqk", qs_sc[...], k_ref[...].astype(mm_dtype),
                       preferred_element_type=jnp.float32)       # (Hb, tq, tkv)

        if mask_mode == "shared":
            s = jnp.where((mref[...] != 0)[None, :, :], _MASK_FILL, s)
        elif mask_mode in ("per_batch", "per_head"):
            s = jnp.where(mref[...] != 0, _MASK_FILL, s)          # (1|Hb, tq, tkv)
        elif mask_mode == "full":
            s = jnp.where(mref[...][:, 0] != 0, _MASK_FILL, s)    # (Hb, tq, tkv)

        # Online softmax update (stats are lane-replicated for dense stores).
        m_prev = m_sc[...]                                        # (Hb, tq, 128)
        s_max = jnp.max(s, axis=-1, keepdims=True)                # (Hb, tq, 1)
        m_next = jnp.maximum(m_prev, s_max)                       # (Hb, tq, 128)
        alpha = jnp.exp(m_prev - m_next)                          # (Hb, tq, 128)
        p = jnp.exp(s - m_next[:, :, :1])                         # (Hb, tq, tkv)
        l_sc[...] = alpha * l_sc[...] + jnp.sum(p, axis=-1, keepdims=True)
        acc_sc[...] = alpha[:, :, :1] * acc_sc[...] + jnp.einsum(
            "bqk,bkd->bqd", p.astype(mm_dtype), v_ref[...].astype(mm_dtype),
            preferred_element_type=jnp.float32)
        m_sc[...] = m_next

        @pl.when(kv == pl.num_programs(2) - 1)
        def _():
            # approx=False keeps exact-match numerics vs the reference softmax.
            l_inv = pl.reciprocal(l_sc[...][:, :, :1], approx=False)
            o_ref[...] = (acc_sc[...] * l_inv).astype(o_ref.dtype)

    return kernel


# ----------------------------------------------------------------------------- wrapper
def attention(query, key, value, mask=None, *, prefer_bf16_matmul=False,
              tq_target=None, tkv_target=None):
    """query/key/value: (B, H, S, D). mask: bool, broadcastable to (H, B, S, S)."""
    B, H, S, D = query.shape
    inv_scale = 1.0 / math.sqrt(H)          # torch: sqrt(query.size()[1]) == sqrt(H)
    BH = B * H

    vmem_limit, tile_budget = _vmem_budgets()
    if tq_target is None:
        tq_target = 1024 if tile_budget >= (24 << 20) else 512
    if tkv_target is None:
        tkv_target = 256

    itemsize = query.dtype.itemsize
    mm_dtype = (jnp.bfloat16
                if (prefer_bf16_matmul and query.dtype == jnp.float32)
                else query.dtype)
    sublane = {4: 8, 2: 16, 1: 32}.get(itemsize, 8)
    q_align = max(sublane, 32) if mask is not None else sublane   # 32: int8 mask tiling

    tq = _pick_tile(S, tq_target, q_align)
    tkv = _pick_tile(S, tkv_target, 128)
    need_pad = (tq is None) or (tkv is None)
    if need_pad:
        # Pad S so aligned flash tiles exist (padded key columns get masked below).
        q_align = max(q_align, 32)
        tkv = max(128, (max(tkv_target, 128) // 128) * 128)
        S_pad = ((S + tkv - 1) // tkv) * tkv
        tq = _pick_tile(S_pad, max(tq_target, q_align), q_align)
        assert tq is not None
    else:
        S_pad = S

    # ---- mask canonicalization (torch applies mask to h.transpose(0,1) == (H,B,S,S))
    mask_mode, mask_arr = "none", None
    if mask is not None:
        m = jnp.asarray(mask)
        if m.ndim > 4:
            raise ValueError("mask with more than 4 dims is not supported")
        shape4 = (1,) * (4 - m.ndim) + tuple(m.shape)
        m4 = m.reshape(shape4)
        head_bcast, batch_bcast = shape4[0] == 1, shape4[1] == 1
        if head_bcast and batch_bcast:
            mask_mode, mask_arr = "shared", jnp.broadcast_to(m4[0, 0], (S, S))
        elif head_bcast:
            mask_mode, mask_arr = "per_batch", jnp.broadcast_to(m4[0], (B, S, S))
        elif batch_bcast:
            mask_mode, mask_arr = "per_head", jnp.broadcast_to(m4[:, 0], (H, S, S))
        else:
            mask_mode, mask_arr = "full", jnp.broadcast_to(m4, (H, B, S, S))
        if need_pad:
            pad = [(0, 0)] * (mask_arr.ndim - 2) + [(0, S_pad - S)] * 2
            mask_arr = jnp.pad(mask_arr != 0, pad, constant_values=True)
    elif need_pad:
        mask_mode = "shared"
        mask_arr = jnp.broadcast_to(jnp.arange(S_pad)[None, :] >= S, (S_pad, S_pad))

    # ---- head blocking / grid
    div_base = H if mask_mode in ("per_batch", "per_head", "full") else BH
    per_head = _per_head_bytes(tq, tkv, D, itemsize, mask_mode != "none")
    NQ = S_pad // tq
    Hb = _pick_head_block(BH, div_base, per_head, tile_budget, NQ)
    NB, NKV = BH // Hb, S_pad // tkv

    q = query.reshape(BH, S, D)
    k = key.reshape(BH, S, D)
    v = value.reshape(BH, S, D)
    if need_pad:
        padw = ((0, 0), (0, S_pad - S), (0, 0))
        q, k, v = (jnp.pad(x, padw) for x in (q, k, v))

    q_spec = pl.BlockSpec((Hb, tq, D), lambda b, qi, ki: (b, qi, 0))
    kv_spec = pl.BlockSpec((Hb, tkv, D), lambda b, qi, ki: (b, ki, 0))
    out_spec = pl.BlockSpec((Hb, tq, D), lambda b, qi, ki: (b, qi, 0))

    operands = [q, k, v]
    in_specs = [q_spec, kv_spec, kv_spec]

    if mask_mode != "none":
        ok_i8 = (((tq % 32 == 0) or (tq == S_pad))
                 and ((tkv % 128 == 0) or (tkv == S_pad)))
        mask_dtype = jnp.int8 if ok_i8 else jnp.int32
        operands.append((mask_arr != 0).astype(mask_dtype))
        G = max(H // Hb, 1)   # head-blocks per batch (flattened index nb = b*G + g)
        if mask_mode == "shared":
            in_specs.append(pl.BlockSpec((tq, tkv), lambda b, qi, ki: (qi, ki)))
        elif mask_mode == "per_batch":
            in_specs.append(pl.BlockSpec(
                (1, tq, tkv), lambda nb, qi, ki: (nb // G, qi, ki)))
        elif mask_mode == "per_head":
            in_specs.append(pl.BlockSpec(
                (Hb, tq, tkv), lambda nb, qi, ki: (nb % G, qi, ki)))
        else:  # full: original (H, B, S, S) layout, no transposed copy materialized
            in_specs.append(pl.BlockSpec(
                (Hb, 1, tq, tkv), lambda nb, qi, ki: (nb % G, nb // G, qi, ki)))

    kernel = _make_kernel(inv_scale, mask_mode, mm_dtype)

    out = pl.pallas_call(
        kernel,
        out_shape=jax.ShapeDtypeStruct((BH, S_pad, D), query.dtype),
        grid_spec=pltpu.PrefetchScalarGridSpec(
            num_scalar_prefetch=0,
            grid=(NB, NQ, NKV),
            in_specs=in_specs,
            out_specs=out_spec,
            scratch_shapes=[
                pltpu.VMEM((Hb, tq, _STATS_LANES), jnp.float32),  # running max
                pltpu.VMEM((Hb, tq, _STATS_LANES), jnp.float32),  # running sum
                pltpu.VMEM((Hb, tq, D), jnp.float32),             # output accumulator
                pltpu.VMEM((Hb, tq, D), mm_dtype),                # pre-scaled q
            ],
        ),
        compiler_params=pltpu.CompilerParams(
            dimension_semantics=("parallel", "parallel", "arbitrary"),
            vmem_limit_bytes=vmem_limit,
        ),
    )(*operands)

    if need_pad:
        out = out[:, :S, :]
    return out.reshape(B, H, S, D)


# ----------------------------------------------------------------------------- reference
def _reference(query, key, value, mask):
    """Pure-JAX reference mirroring the PyTorch forward."""
    B, H, S, D = query.shape
    scale = math.sqrt(H)
    h = jnp.einsum('bhik,bhjk->bhij', query, key) / scale
    if mask is not None:
        h_t = jnp.transpose(h, (1, 0, 2, 3))                       # (H, B, S, S)
        m = jnp.broadcast_to(mask, h_t.shape)
        h_t = jnp.where(m, jnp.finfo(h.dtype).min, h_t)            # -inf -> nan_to_num
        h = jnp.transpose(h_t, (1, 0, 2, 3))
    w = jax.nn.softmax(h, axis=-1)
    return jnp.einsum('bhij,bhjv->bhiv', w, value)


if __name__ == "__main__":
    root = jax.random.PRNGKey(0)
    kq, kk, kv, km, kb = jax.random.split(root, 5)

    B, H, S, D = 2, 4, 8, 32
    query = jax.random.normal(kq, (B, H, S, D), jnp.float32)
    key_t = jax.random.normal(kk, (B, H, S, D), jnp.float32)
    value = jax.random.normal(kv, (B, H, S, D), jnp.float32)

    # 1) shared (S, S) causal mask -> single resident int8 copy for all heads/batches
    causal = jnp.triu(jnp.ones((S, S), dtype=bool), k=1)
    out = jax.block_until_ready(attention(query, key_t, value, causal))
    assert out.shape == (B, H, S, D)
    assert jnp.allclose(out, _reference(query, key_t, value, causal), atol=2e-5, rtol=2e-5)

    # 2) no mask -> mask operand elided entirely
    out2 = jax.block_until_ready(attention(query, key_t, value, None))
    assert jnp.allclose(out2, _reference(query, key_t, value, None), atol=2e-5, rtol=2e-5)

    # 3) general (H, B, S, S) mask -> streamed int8 in original layout (no transposed copy)
    full_mask = jax.random.bernoulli(km, 0.3, (H, B, S, S))
    out3 = jax.block_until_ready(attention(query, key_t, value, full_mask))
    assert jnp.allclose(out3, _reference(query, key_t, value, full_mask), atol=2e-5, rtol=2e-5)

    # 4) head-broadcast (1, B, 1, S) mask -> per-batch streamed path (only B unique slices)
    bmask = jax.random.bernoulli(kb, 0.3, (1, B, 1, S))
    out4 = jax.block_until_ready(attention(query, key_t, value, bmask))
    assert jnp.allclose(out4, _reference(query, key_t, value, bmask), atol=2e-5, rtol=2e-5)

    # 5) non-divisible long sequence -> padded flash path (no full (S,S) VMEM blowup)
    B2, H2, S2, D2 = 1, 2, 520, 32
    k1, k2, k3 = jax.random.split(jax.random.PRNGKey(1), 3)
    q5 = jax.random.normal(k1, (B2, H2, S2, D2), jnp.float32)
    k5 = jax.random.normal(k2, (B2, H2, S2, D2), jnp.float32)
    v5 = jax.random.normal(k3, (B2, H2, S2, D2), jnp.float32)
    out5 = jax.block_until_ready(attention(q5, k5, v5, None))
    assert jnp.allclose(out5, _reference(q5, k5, v5, None), atol=2e-5, rtol=2e-5)

    print("KERNEL_OK")
</pallas_src>

<mosaic_0001>
module attributes {stable_mosaic.version = 11 : i64} {
  func.func @kernel(%arg0: i32, %arg1: i32, %arg2: i32, %arg3: memref<4x8x32xf32, #tpu.memory_space<vmem>>, %arg4: memref<4x8x32xf32, #tpu.memory_space<vmem>>, %arg5: memref<4x8x32xf32, #tpu.memory_space<vmem>>, %arg6: memref<8x8xi8, #tpu.memory_space<vmem>>, %arg7: memref<4x8x32xf32, #tpu.memory_space<vmem>>, %arg8: memref<4x8x128xf32, #tpu.memory_space<vmem>>, %arg9: memref<4x8x128xf32, #tpu.memory_space<vmem>>, %arg10: memref<4x8x32xf32, #tpu.memory_space<vmem>>, %arg11: memref<4x8x32xf32, #tpu.memory_space<vmem>>) attributes {dimension_semantics = [#tpu.dimension_semantics<parallel>, #tpu.dimension_semantics<parallel>, #tpu.dimension_semantics<arbitrary>], iteration_bounds = array<i64: 2, 1, 1>, scalar_prefetch = 0 : i64, scratch_operands = 4 : i64, tpu.core_type = #tpu.core_type<tc>, window_params = [{transform_indices = @transform_0, window_bounds = array<i64: 4, 8, 32>}, {transform_indices = @transform_1, window_bounds = array<i64: 4, 8, 32>}, {transform_indices = @transform_2, window_bounds = array<i64: 4, 8, 32>}, {transform_indices = @transform_3, window_bounds = array<i64: 8, 8>}, {transform_indices = @transform_4, window_bounds = array<i64: 4, 8, 32>}]} {
    %c0_i32 = arith.constant 0 : i32
    %0 = arith.cmpi eq, %arg2, %c0_i32 : i32
    %1 = arith.extui %0 : i1 to i32
    %c0_i32_0 = arith.constant 0 : i32
    %2 = arith.cmpi ne, %1, %c0_i32_0 : i32
    scf.if %2 {
      %cst_35 = arith.constant 0xFF800000 : f32
      %44 = vector.broadcast %cst_35 : f32 to vector<4x8x128xf32>
      %c0_36 = arith.constant 0 : index
      %c0_37 = arith.constant 0 : index
      %c0_38 = arith.constant 0 : index
      %45 = vector.load %arg8[%c0_36, %c0_37, %c0_38] : memref<4x8x128xf32, #tpu.memory_space<vmem>>, vector<4x8x128xf32>
      tpu.vector_store %arg8[%c0_36, %c0_37, %c0_38], %44 {strides = array<i32>} : memref<4x8x128xf32, #tpu.memory_space<vmem>>, vector<4x8x128xf32>,
      %cst_39 = arith.constant 0.000000e+00 : f32
      %46 = vector.broadcast %cst_39 : f32 to vector<4x8x128xf32>
      %c0_40 = arith.constant 0 : index
      %c0_41 = arith.constant 0 : index
      %c0_42 = arith.constant 0 : index
      %47 = vector.load %arg9[%c0_40, %c0_41, %c0_42] : memref<4x8x128xf32, #tpu.memory_space<vmem>>, vector<4x8x128xf32>
      tpu.vector_store %arg9[%c0_40, %c0_41, %c0_42], %46 {strides = array<i32>} : memref<4x8x128xf32, #tpu.memory_space<vmem>>, vector<4x8x128xf32>,
      %cst_43 = arith.constant 0.000000e+00 : f32
      %48 = vector.broadcast %cst_43 : f32 to vector<4x8x32xf32>
      %c0_44 = arith.constant 0 : index
      %c0_45 = arith.constant 0 : index
      %c0_46 = arith.constant 0 : index
      %49 = vector.load %arg10[%c0_44, %c0_45, %c0_46] : memref<4x8x32xf32, #tpu.memory_space<vmem>>, vector<4x8x32xf32>
      tpu.vector_store %arg10[%c0_44, %c0_45, %c0_46], %48 {strides = array<i32>} : memref<4x8x32xf32, #tpu.memory_space<vmem>>, vector<4x8x32xf32>,
      %c0_47 = arith.constant 0 : index
      %c0_48 = arith.constant 0 : index
      %c0_49 = arith.constant 0 : index
      %50 = vector.load %arg3[%c0_47, %c0_48, %c0_49] : memref<4x8x32xf32, #tpu.memory_space<vmem>>, vector<4x8x32xf32>
      %cst_50 = arith.constant 5.000000e-01 : f32
      %51 = vector.broadcast %cst_50 : f32 to vector<4x8x32xf32>
      %52 = arith.mulf %50, %51 : vector<4x8x32xf32>
      %c0_51 = arith.constant 0 : index
      %c0_52 = arith.constant 0 : index
      %c0_53 = arith.constant 0 : index
      %53 = vector.load %arg11[%c0_51, %c0_52, %c0_53] : memref<4x8x32xf32, #tpu.memory_space<vmem>>, vector<4x8x32xf32>
      tpu.vector_store %arg11[%c0_51, %c0_52, %c0_53], %52 {strides = array<i32>} : memref<4x8x32xf32, #tpu.memory_space<vmem>>, vector<4x8x32xf32>,
    } else {
    }
    %c0 = arith.constant 0 : index
    %c0_1 = arith.constant 0 : index
    %c0_2 = arith.constant 0 : index
    %3 = vector.load %arg11[%c0, %c0_1, %c0_2] : memref<4x8x32xf32, #tpu.memory_space<vmem>>, vector<4x8x32xf32>
    %c0_3 = arith.constant 0 : index
    %c0_4 = arith.constant 0 : index
    %c0_5 = arith.constant 0 : index
    %4 = vector.load %arg4[%c0_3, %c0_4, %c0_5] : memref<4x8x32xf32, #tpu.memory_space<vmem>>, vector<4x8x32xf32>
    "tpu.trace_start"() <{level = 10 : i32, message = "bqd,bkd->bqk"}> : () -> ()
    %cst = arith.constant dense<0.000000e+00> : vector<4x8x8xf32>
    %5 = tpu.matmul %3, %4, %cst {dimension_numbers = #tpu.dot_dimension_numbers<[2], [2], [1], [1], [0, 0, 0, 1, 1, 1], [0], [0]>} : vector<4x8x32xf32>, vector<4x8x32xf32>, vector<4x8x8xf32> -> vector<4x8x8xf32>
    "tpu.trace_stop"() : () -> ()
    %c0_6 = arith.constant 0 : index
    %c0_7 = arith.constant 0 : index
    %6 = vector.load %arg6[%c0_6, %c0_7] : memref<8x8xi8, #tpu.memory_space<vmem>>, vector<8x8xi8>
    %c0_i8 = arith.constant 0 : i8
    %7 = vector.broadcast %c0_i8 : i8 to vector<8x8xi8>
    %8 = arith.cmpi ne, %6, %7 : vector<8x8xi8>
    %9 = vector.shape_cast %8 : vector<8x8xi1> to vector<1x8x8xi1>
    %cst_8 = arith.constant -3.40282347E+38 : f32
    %10 = vector.shape_cast %9 : vector<1x8x8xi1> to vector<1x8x8xi1>
    %11 = vector.broadcast %10 : vector<1x8x8xi1> to vector<4x8x8xi1>
    %12 = vector.broadcast %cst_8 : f32 to vector<4x8x8xf32>
    %13 = arith.select %11, %12, %5 : vector<4x8x8xi1>, vector<4x8x8xf32>
    %c0_9 = arith.constant 0 : index
    %c0_10 = arith.constant 0 : index
    %c0_11 = arith.constant 0 : index
    %14 = vector.load %arg8[%c0_9, %c0_10, %c0_11] : memref<4x8x128xf32, #tpu.memory_space<vmem>>, vector<4x8x128xf32>
    %cst_12 = arith.constant dense<0xFF800000> : vector<4x8xf32>
    %15 = vector.multi_reduction <maximumf>, %13, %cst_12 [2] : vector<4x8x8xf32> to vector<4x8xf32>
    %16 = vector.shape_cast %15 : vector<4x8xf32> to vector<4x8x1xf32>
    %17 = vector.broadcast %16 : vector<4x8x1xf32> to vector<4x8x128xf32>
    %18 = arith.maximumf %14, %17 : vector<4x8x128xf32>
    %19 = arith.subf %14, %18 : vector<4x8x128xf32>
    %20 = math.exp %19 : vector<4x8x128xf32>
    %21 = vector.extract_strided_slice %18 {offsets = [0, 0, 0], sizes = [4, 8, 1], strides = [1, 1, 1]} : vector<4x8x128xf32> to vector<4x8x1xf32>
    %22 = vector.broadcast %21 : vector<4x8x1xf32> to vector<4x8x8xf32>
    %23 = arith.subf %13, %22 : vector<4x8x8xf32>
    %24 = math.exp %23 : vector<4x8x8xf32>
    %c0_13 = arith.constant 0 : index
    %c0_14 = arith.constant 0 : index
    %c0_15 = arith.constant 0 : index
    %25 = vector.load %arg9[%c0_13, %c0_14, %c0_15] : memref<4x8x128xf32, #tpu.memory_space<vmem>>, vector<4x8x128xf32>
    %26 = arith.mulf %20, %25 : vector<4x8x128xf32>
    %cst_16 = arith.constant dense<0.000000e+00> : vector<4x8xf32>
    %27 = vector.multi_reduction <add>, %24, %cst_16 [2] : vector<4x8x8xf32> to vector<4x8xf32>
    %28 = vector.shape_cast %27 : vector<4x8xf32> to vector<4x8x1xf32>
    %29 = vector.broadcast %28 : vector<4x8x1xf32> to vector<4x8x128xf32>
    %30 = arith.addf %26, %29 : vector<4x8x128xf32>
    %c0_17 = arith.constant 0 : index
    %c0_18 = arith.constant 0 : index
    %c0_19 = arith.constant 0 : index
    %31 = vector.load %arg9[%c0_17, %c0_18, %c0_19] : memref<4x8x128xf32, #tpu.memory_space<vmem>>, vector<4x8x128xf32>
    tpu.vector_store %arg9[%c0_17, %c0_18, %c0_19], %30 {strides = array<i32>} : memref<4x8x128xf32, #tpu.memory_space<vmem>>, vector<4x8x128xf32>,
    %32 = vector.extract_strided_slice %20 {offsets = [0, 0, 0], sizes = [4, 8, 1], strides = [1, 1, 1]} : vector<4x8x128xf32> to vector<4x8x1xf32>
    %c0_20 = arith.constant 0 : index
    %c0_21 = arith.constant 0 : index
    %c0_22 = arith.constant 0 : index
    %33 = vector.load %arg10[%c0_20, %c0_21, %c0_22] : memref<4x8x32xf32, #tpu.memory_space<vmem>>, vector<4x8x32xf32>
    %34 = vector.broadcast %32 : vector<4x8x1xf32> to vector<4x8x32xf32>
    %35 = arith.mulf %34, %33 : vector<4x8x32xf32>
    %c0_23 = arith.constant 0 : index
    %c0_24 = arith.constant 0 : index
    %c0_25 = arith.constant 0 : index
    %36 = vector.load %arg5[%c0_23, %c0_24, %c0_25] : memref<4x8x32xf32, #tpu.memory_space<vmem>>, vector<4x8x32xf32>
    "tpu.trace_start"() <{level = 10 : i32, message = "bqk,bkd->bqd"}> : () -> ()
    %cst_26 = arith.constant dense<0.000000e+00> : vector<4x8x32xf32>
    %37 = tpu.matmul %24, %36, %cst_26 {dimension_numbers = #tpu.dot_dimension_numbers<[2], [1], [1], [2], [0, 0, 0, 1, 1, 2], [0], [0]>} : vector<4x8x8xf32>, vector<4x8x32xf32>, vector<4x8x32xf32> -> vector<4x8x32xf32>
    "tpu.trace_stop"() : () -> ()
    %38 = arith.addf %35, %37 : vector<4x8x32xf32>
    %c0_27 = arith.constant 0 : index
    %c0_28 = arith.constant 0 : index
    %c0_29 = arith.constant 0 : index
    %39 = vector.load %arg10[%c0_27, %c0_28, %c0_29] : memref<4x8x32xf32, #tpu.memory_space<vmem>>, vector<4x8x32xf32>
    tpu.vector_store %arg10[%c0_27, %c0_28, %c0_29], %38 {strides = array<i32>} : memref<4x8x32xf32, #tpu.memory_space<vmem>>, vector<4x8x32xf32>,
    %c0_30 = arith.constant 0 : index
    %c0_31 = arith.constant 0 : index
    %c0_32 = arith.constant 0 : index
    %40 = vector.load %arg8[%c0_30, %c0_31, %c0_32] : memref<4x8x128xf32, #tpu.memory_space<vmem>>, vector<4x8x128xf32>
    tpu.vector_store %arg8[%c0_30, %c0_31, %c0_32], %18 {strides = array<i32>} : memref<4x8x128xf32, #tpu.memory_space<vmem>>, vector<4x8x128xf32>,
    %c0_i32_33 = arith.constant 0 : i32
    %41 = arith.cmpi eq, %arg2, %c0_i32_33 : i32
    %42 = arith.extui %41 : i1 to i32
    %c0_i32_34 = arith.constant 0 : i32
    %43 = arith.cmpi ne, %42, %c0_i32_34 : i32
    scf.if %43 {
      %c0_35 = arith.constant 0 : index
      %c0_36 = arith.constant 0 : index
      %c0_37 = arith.constant 0 : index
      %44 = vector.load %arg9[%c0_35, %c0_36, %c0_37] : memref<4x8x128xf32, #tpu.memory_space<vmem>>, vector<4x8x128xf32>
      %45 = vector.extract_strided_slice %44 {offsets = [0, 0, 0], sizes = [4, 8, 1], strides = [1, 1, 1]} : vector<4x8x128xf32> to vector<4x8x1xf32>
      %46 = tpu.reciprocal %45 : vector<4x8x1xf32> -> vector<4x8x1xf32>
      %c0_38 = arith.constant 0 : index
      %c0_39 = arith.constant 0 : index
      %c0_40 = arith.constant 0 : index
      %47 = vector.load %arg10[%c0_38, %c0_39, %c0_40] : memref<4x8x32xf32, #tpu.memory_space<vmem>>, vector<4x8x32xf32>
      %48 = vector.broadcast %46 : vector<4x8x1xf32> to vector<4x8x32xf32>
      %49 = arith.mulf %47, %48 : vector<4x8x32xf32>
      %c0_41 = arith.constant 0 : index
      %c0_42 = arith.constant 0 : index
      %c0_43 = arith.constant 0 : index
      %50 = vector.load %arg7[%c0_41, %c0_42, %c0_43] : memref<4x8x32xf32, #tpu.memory_space<vmem>>, vector<4x8x32xf32>
      tpu.vector_store %arg7[%c0_41, %c0_42, %c0_43], %49 {strides = array<i32>} : memref<4x8x32xf32, #tpu.memory_space<vmem>>, vector<4x8x32xf32>,
    } else {
    }
    return
  }
  func.func @transform_0(%arg0: i32, %arg1: i32, %arg2: i32) -> (i32, i32, i32) {
    %c0_i32 = arith.constant 0 : i32
    %c0_i32_0 = arith.constant 0 : i32
    return %arg0, %arg1, %c0_i32 : i32, i32, i32
  }
  func.func @transform_1(%arg0: i32, %arg1: i32, %arg2: i32) -> (i32, i32, i32) {
    %c0_i32 = arith.constant 0 : i32
    %c0_i32_0 = arith.constant 0 : i32
    return %arg0, %arg2, %c0_i32 : i32, i32, i32
  }
  func.func @transform_2(%arg0: i32, %arg1: i32, %arg2: i32) -> (i32, i32, i32) {
    %c0_i32 = arith.constant 0 : i32
    %c0_i32_0 = arith.constant 0 : i32
    return %arg0, %arg2, %c0_i32 : i32, i32, i32
  }
  func.func @transform_3(%arg0: i32, %arg1: i32, %arg2: i32) -> (i32, i32) {
    %c0_i32 = arith.constant 0 : i32
    return %arg1, %arg2 : i32, i32
  }
  func.func @transform_4(%arg0: i32, %arg1: i32, %arg2: i32) -> (i32, i32, i32) {
    %c0_i32 = arith.constant 0 : i32
    %c0_i32_0 = arith.constant 0 : i32
    return %arg0, %arg1, %c0_i32 : i32, i32, i32
  }
}

</mosaic_0001>

<llo_original>
// kernel: tpu_custom_call.1
$region0: #{tpu_custom_call.1}
  #allocation0 [shape = 'u32[]', space=smem, size = 0x4, offset = 0x4, fixed_abs, tag = 'smem constant byte address 0x4 - core index']
  #allocation1 [shape = 'u32[144,128]{1,0:T(1,128)}', space=vmem, size = 0x12000, scoped, tag = 'internal scratch']
  #allocation2 [shape = 'f32[4,8,128]{2,1,0:T(8,128)}', space=vmem, size = 0x4000, scoped, tag = 'scratch operand']
  #allocation3 [shape = 'f32[4,8,128]{2,1,0:T(8,128)}', space=vmem, size = 0x4000, scoped, tag = 'scratch operand']
  #allocation4 [shape = 'f32[4,8,32]{2,1,0:T(8,128)}', space=vmem, size = 0x4000, scoped, tag = 'scratch operand']
  #allocation5 [shape = 'f32[4,8,32]{2,1,0:T(8,128)}', space=vmem, size = 0x4000, scoped, tag = 'scratch operand']
  %s0 = inlined_call_operand.hbm [shape: f32[8,8,32], index: 0, kind: input, shape index: {}]
  %s1 = inlined_call_operand.hbm [shape: f32[8,8,32], index: 1, kind: input, shape index: {}]
  %s2 = inlined_call_operand.hbm [shape: f32[8,8,32], index: 2, kind: input, shape index: {}]
  %s3 = inlined_call_operand.vmem [shape: s8[8,8], index: 3, kind: input, shape index: {}]
  %s4 = inlined_call_operand.hbm [shape: f32[8,8,32], index: 4, kind: output, shape index: {}]
  %s5 = sld [smem:[#allocation0]]
  $region69: #{tpu_custom_call.1} parent=0
    _
  %s7 = ssub.s32 1, %s5
  %s8 = scalar_select 0, %s7, %s5
  $region1: #{tpu_custom_call.1} parent=0
    #allocation6 [shape = 'u8[32768]{0}', space=vmem, size = 0x8000, scoped, tag = 'input window, operand 0']
    #allocation7 [shape = 's32[2]{0}', space=sflag, size = 0x8, scoped, tag = 'scoped memory for tpu_custom_call.1']
    #allocation8 [shape = 's32[2]{0}', space=sflag, size = 0x8, scoped, tag = 'scoped memory for tpu_custom_call.1']
    #allocation9 [shape = 'u8[32768]{0}', space=vmem, size = 0x8000, scoped, tag = 'input window, operand 1']
    #allocation10 [shape = 's32[2]{0}', space=sflag, size = 0x8, scoped, tag = 'scoped memory for tpu_custom_call.1']
    #allocation11 [shape = 'u8[32768]{0}', space=vmem, size = 0x8000, scoped, tag = 'input window, operand 2']
    #allocation12 [shape = 'u8[32768]{0}', space=vmem, size = 0x8000, scoped, tag = 'output window, operand 0']
    %9 = vsyncpa [#allocation7], 0
    %s10 = scalar_lea.sflag [#allocation7], 1
    %11 = vsyncpa %s10, 0
    %12 = vsyncpa [#allocation10], 0
    %s13 = scalar_lea.sflag [#allocation10], 1
    %14 = vsyncpa %s13, 0
    %15 = vsyncpa [#allocation8], 0
    %s16 = scalar_lea.sflag [#allocation8], 1
    %17 = vsyncpa %s16, 0
    loop: start=0, step=1, limit=4
    $region2: #{tpu_custom_call.1} parent=1 // loop_pre_header
      _
    $region3: #{tpu_custom_call.1} parent=1 // loop_header
      %s19 = sphi 0, %s23
      %p20 = scmp.ge.s32.totalorder %s19, 4
      %s26 = sphi 0, %s45
      %s27 = sphi 0, %s41
      %s28 = sphi 0, %s37
      %s29 = sphi 0, %s26
      %s30 = sphi 0, %s27
      %s31 = sphi 0, %s28
      %s32 = sphi 0, %s29
      %s33 = sphi 0, %s30
      %s34 = sphi 0, %s31
      %s50 = sphi 0, %s52
      %s53 = sphi 0, %s50
      %s54 = sphi 0, %s53
      %s70 = sphi 0, %s54
      %s78 = sphi 0, %s80
      %s81 = sphi 0, %s78
      %s82 = sphi 0, %s81
      %s98 = sphi 0, %s82
      %s106 = sphi 0, %s108
      %s109 = sphi 0, %s106
      %s110 = sphi 0, %s109
      %s126 = sphi 0, %s110
      %s134 = sphi 0, %s136
      %s137 = sphi 0, %s134
      %s138 = sphi 0, %s137
      %s154 = sphi 0, %s138
      %s162 = sphi 0, %s164
      %s165 = sphi 0, %s162
      %s166 = sphi 0, %s165
      %s182 = sphi 0, %s166
    $region4: #{tpu_custom_call.1} parent=1 // loop_header_branch
      %22 = sbr.rel (%p20) target = $region8
    $region5: #{tpu_custom_call.1} parent=1 // loop_body
      %s24 = ssub.s32 %s19, 1
      %s25 = ssub.s32 %s19, 2
      %s35 = sadd.s32 1, %s28
      %p36 = scmp.ge.s32.totalorder %s35, 1
      %s37 = scalar_select %p36, 0, %s35
      %s38 = sadd.s32 1, %s27
      %s39 = scalar_select %p36, %s38, %s27
      %p40 = scmp.ge.s32.totalorder %s39, 1
      %s41 = scalar_select %p40, 0, %s39
      %s42 = sadd.s32 1, %s26
      %s43 = scalar_select %p40, %s42, %s26
      %p44 = scmp.ge.s32.totalorder %s43, 2
      %s45 = scalar_select %p44, 0, %s43
      %s46 = ssub.s32 %s26, %s45
      %s47 = ssub.s32 %s27, %s41
      %s48 = sor.u32 %s46, %s47
      %p49 = scmp.eq.s32.totalorder %s48, 0
      %s51 = sadd.s32 %s50, 1
      %s52 = scalar_select %p49, %s50, %s51
      %p55 = pneg %p49
      %p56 = scmp.eq.s32.totalorder %s19, 1
      %p57 = por %p55, %p56
      %p58 = scmp.ne.s32.totalorder %s50, %s53
      %p59 = scmp.eq.s32.totalorder %s19, 0
      %p60 = por %p58, %p59
      %p61 = scmp.ne.s32.totalorder %s50, %s53
      %p62 = scmp.eq.s32.totalorder %s24, 1
      %p63 = por %p61, %p62
      %p64 = scmp.ne.s32.totalorder %s53, %s54
      %p65 = scmp.eq.s32.totalorder %s24, 0
      %p66 = por %p64, %p65
      %p67 = scmp.ne.s32.totalorder %s53, %s54
      %p68 = scmp.eq.s32.totalorder %s25, 1
      %p69 = por %p67, %p68
      %p71 = scmp.ne.s32.totalorder %s54, %s70
      %p72 = scmp.eq.s32.totalorder %s25, 0
      %p73 = por %p71, %p72
      %s74 = ssub.s32 %s26, %s45
      %s75 = ssub.s32 %s28, %s37
      %s76 = sor.u32 %s74, %s75
      %p77 = scmp.eq.s32.totalorder %s76, 0
      %s79 = sadd.s32 %s78, 1
      %s80 = scalar_select %p77, %s78, %s79
      %p83 = pneg %p77
      %p84 = scmp.eq.s32.totalorder %s19, 1
      %p85 = por %p83, %p84
      %p86 = scmp.ne.s32.totalorder %s78, %s81
      %p87 = scmp.eq.s32.totalorder %s19, 0
      %p88 = por %p86, %p87
      %p89 = scmp.ne.s32.totalorder %s78, %s81
      %p90 = scmp.eq.s32.totalorder %s24, 1
      %p91 = por %p89, %p90
      %p92 = scmp.ne.s32.totalorder %s81, %s82
      %p93 = scmp.eq.s32.totalorder %s24, 0
      %p94 = por %p92, %p93
      %p95 = scmp.ne.s32.totalorder %s81, %s82
      %p96 = scmp.eq.s32.totalorder %s25, 1
      %p97 = por %p95, %p96
      %p99 = scmp.ne.s32.totalorder %s82, %s98
      %p100 = scmp.eq.s32.totalorder %s25, 0
      %p101 = por %p99, %p100
      %s102 = ssub.s32 %s26, %s45
      %s103 = ssub.s32 %s28, %s37
      %s104 = sor.u32 %s102, %s103
      %p105 = scmp.eq.s32.totalorder %s104, 0
      %s107 = sadd.s32 %s106, 1
      %s108 = scalar_select %p105, %s106, %s107
      %p111 = pneg %p105
      %p112 = scmp.eq.s32.totalorder %s19, 1
      %p113 = por %p111, %p112
      %p114 = scmp.ne.s32.totalorder %s106, %s109
      %p115 = scmp.eq.s32.totalorder %s19, 0
      %p116 = por %p114, %p115
      %p117 = scmp.ne.s32.totalorder %s106, %s109
      %p118 = scmp.eq.s32.totalorder %s24, 1
      %p119 = por %p117, %p118
      %p120 = scmp.ne.s32.totalorder %s109, %s110
      %p121 = scmp.eq.s32.totalorder %s24, 0
      %p122 = por %p120, %p121
      %p123 = scmp.ne.s32.totalorder %s109, %s110
      %p124 = scmp.eq.s32.totalorder %s25, 1
      %p125 = por %p123, %p124
      %p127 = scmp.ne.s32.totalorder %s110, %s126
      %p128 = scmp.eq.s32.totalorder %s25, 0
      %p129 = por %p127, %p128
      %s130 = ssub.s32 %s27, %s41
      %s131 = ssub.s32 %s28, %s37
      %s132 = sor.u32 %s130, %s131
      %p133 = scmp.eq.s32.totalorder %s132, 0
      %s135 = sadd.s32 %s134, 1
      %s136 = scalar_select %p133, %s134, %s135
      %p139 = pneg %p133
      %p140 = scmp.eq.s32.totalorder %s19, 1
      %p141 = por %p139, %p140
      %p142 = scmp.ne.s32.totalorder %s134, %s137
      %p143 = scmp.eq.s32.totalorder %s19, 0
      %p144 = por %p142, %p143
      %p145 = scmp.ne.s32.totalorder %s134, %s137
      %p146 = scmp.eq.s32.totalorder %s24, 1
      %p147 = por %p145, %p146
      %p148 = scmp.ne.s32.totalorder %s137, %s138
      %p149 = scmp.eq.s32.totalorder %s24, 0
      %p150 = por %p148, %p149
      %p151 = scmp.ne.s32.totalorder %s137, %s138
      %p152 = scmp.eq.s32.totalorder %s25, 1
      %p153 = por %p151, %p152
      %p155 = scmp.ne.s32.totalorder %s138, %s154
      %p156 = scmp.eq.s32.totalorder %s25, 0
      %p157 = por %p155, %p156
      %s158 = ssub.s32 %s26, %s45
      %s159 = ssub.s32 %s27, %s41
      %s160 = sor.u32 %s158, %s159
      %p161 = scmp.eq.s32.totalorder %s160, 0
      %s163 = sadd.s32 %s162, 1
      %s164 = scalar_select %p161, %s162, %s163
      %p167 = pneg %p161
      %p168 = scmp.eq.s32.totalorder %s19, 1
      %p169 = por %p167, %p168
      %p170 = scmp.ne.s32.totalorder %s162, %s165
      %p171 = scmp.eq.s32.totalorder %s19, 0
      %p172 = por %p170, %p171
      %p173 = scmp.ne.s32.totalorder %s162, %s165
      %p174 = scmp.eq.s32.totalorder %s24, 1
      %p175 = por %p173, %p174
      %p176 = scmp.ne.s32.totalorder %s165, %s166
      %p177 = scmp.eq.s32.totalorder %s24, 0
      %p178 = por %p176, %p177
      %p179 = scmp.ne.s32.totalorder %s165, %s166
      %p180 = scmp.eq.s32.totalorder %s25, 1
      %p181 = por %p179, %p180
      %p183 = scmp.ne.s32.totalorder %s166, %s182
      %p184 = scmp.eq.s32.totalorder %s25, 0
      %p185 = por %p183, %p184
      %p186 = scmp.le.s32.totalorder 1, %s19
      %p187 = scmp.lt.s32.totalorder %s19, 3
      %p188 = pnand %p186, %p187
      %p189 = pneg %p188
      // Predicated region
      $region9: #{tpu_custom_call.1} parent=5 // pred_check
        _
      $region10: #{tpu_custom_call.1} parent=5 // pred_check_branch
        %191 = sbr.rel (%p188) target = $region12
      $region11: #{tpu_custom_call.1} parent=5 // pred_region
        %s192 = ssub.s32 %s19, 1
        // Predicated region
        $region13: #{tpu_custom_call.1} parent=11 // pred_check
          %p193 = pneg %p150
        $region14: #{tpu_custom_call.1} parent=11 // pred_check_branch
          %195 = sbr.rel (%p193) target = $region16
        $region15: #{tpu_custom_call.1} parent=11 // pred_region
          %p196 = scmp.lt.s32.totalorder %s30, 0
          %s197 = scalar_select %p196, %s30, 0
          %p198 = scmp.lt.s32.totalorder %s31, 0
          %s199 = scalar_select %p198, %s31, 0
          %s200 = sadd.s32 %s199, %s197
          %s201 = smul.addr %s200, 2
          %s202 = scalar_lea.vmem %s3, %s201
        $region16: #{tpu_custom_call.1} parent=11 // pred_fallthru
          _
      $region12: #{tpu_custom_call.1} parent=5 // pred_fallthru
        _
      %p203 = scmp.lt.s32.totalorder %s19, 2
      // Predicated region
      $region17: #{tpu_custom_call.1} parent=5 // pred_check
        %p204 = pneg %p203
      $region18: #{tpu_custom_call.1} parent=5 // pred_check_branch
        %206 = sbr.rel (%p204) target = $region20
      $region19: #{tpu_custom_call.1} parent=5 // pred_region
        // Predicated region
        $region21: #{tpu_custom_call.1} parent=19 // pred_check
          %p207 = pneg %p60
        $region22: #{tpu_custom_call.1} parent=19 // pred_check_branch
          %209 = sbr.rel (%p207) target = $region24
        $region23: #{tpu_custom_call.1} parent=19 // pred_region
          %s210 = sand.u32 %s50, 1
          %s211 = scalar_lea.sflag [#allocation7], %s210
          %s212 = sand.u32 %s50, 1
          %s213 = smul.addr %s212, 32
          %s214 = scalar_lea.vmem [#allocation6], %s213
          %s215 = smul.u32 4, %s26
          %s217 = ssub.s32 512, 512
          %218 = vsyncadd %s211, %s217
          %s219 = sadd.s32 %s27, %s215
          %s220 = smul.addr %s219, 128
          %s221 = scalar_lea.hbm %s0, %s220
          %s222 = sshll.u32 %s214, 4
          %s223 = int_to_ptr.vmem [resolvable:$true] %s222
          %228 = dma.hbm_to_vmem [thread:$0]  %s221, 512, %s223, %s211, 128, 128, 8
        $region24: #{tpu_custom_call.1} parent=19 // pred_fallthru
          _
        // Predicated region
        $region25: #{tpu_custom_call.1} parent=19 // pred_check
          %p229 = pneg %p88
        $region26: #{tpu_custom_call.1} parent=19 // pred_check_branch
          %231 = sbr.rel (%p229) target = $region28
        $region27: #{tpu_custom_call.1} parent=19 // pred_region
          %s232 = sand.u32 %s19, 1
          %s233 = scalar_lea.sflag [#allocation10], %s232
          %s234 = sand.u32 %s78, 1
          %s235 = smul.addr %s234, 32
          %s236 = scalar_lea.vmem [#allocation9], %s235
          %s237 = smul.u32 4, %s26
          %s239 = ssub.s32 512, 512
          %240 = vsyncadd %s233, %s239
          %s241 = sadd.s32 %s28, %s237
          %s242 = smul.addr %s241, 128
          %s243 = scalar_lea.hbm %s1, %s242
          %s244 = sshll.u32 %s236, 4
          %s245 = int_to_ptr.vmem [resolvable:$true] %s244
          %250 = dma.hbm_to_vmem [thread:$0]  %s243, 512, %s245, %s233, 128, 128, 8
        $region28: #{tpu_custom_call.1} parent=19 // pred_fallthru
          _
        // Predicated region
        $region29: #{tpu_custom_call.1} parent=19 // pred_check
          %p251 = pneg %p116
        $region30: #{tpu_custom_call.1} parent=19 // pred_check_branch
          %253 = sbr.rel (%p251) target = $region32
        $region31: #{tpu_custom_call.1} parent=19 // pred_region
          %s254 = sand.u32 %s19, 1
          %s255 = scalar_lea.sflag [#allocation10], %s254
          %s256 = sand.u32 %s106, 1
          %s257 = smul.addr %s256, 32
          %s258 = scalar_lea.vmem [#allocation11], %s257
          %s259 = smul.u32 4, %s26
          %s261 = ssub.s32 512, 512
          %262 = vsyncadd %s255, %s261
          %s263 = sadd.s32 %s28, %s259
          %s264 = smul.addr %s263, 128
          %s265 = scalar_lea.hbm %s2, %s264
          %s266 = sshll.u32 %s258, 4
          %s267 = int_to_ptr.vmem [resolvable:$true] %s266
          %272 = dma.hbm_to_vmem [thread:$0]  %s265, 512, %s267, %s255, 128, 128, 8
        $region32: #{tpu_custom_call.1} parent=19 // pred_fallthru
          _
      $region20: #{tpu_custom_call.1} parent=5 // pred_fallthru
        _
      %p273 = scmp.le.s32.totalorder 1, %s19
      %p274 = scmp.lt.s32.totalorder %s19, 3
      %p275 = pnand %p273, %p274
      %p276 = pneg %p275
      // Predicated region
      $region33: #{tpu_custom_call.1} parent=5 // pred_check
        _
      $region34: #{tpu_custom_call.1} parent=5 // pred_check_branch
        %278 = sbr.rel (%p275) target = $region36
      $region35: #{tpu_custom_call.1} parent=5 // pred_region
        %s279 = ssub.s32 %s19, 1
        %s280 = sand.u32 %s53, 1
        %s281 = scalar_lea.sflag [#allocation7], %s280
        %s282 = sand.u32 %s53, 1
        %s283 = smul.addr %s282, 32
        %s284 = scalar_lea.vmem [#allocation6], %s283
        // Predicated region
        $region37: #{tpu_custom_call.1} parent=35 // pred_check
          %p285 = pneg %p66
        $region38: #{tpu_custom_call.1} parent=35 // pred_check_branch
          %287 = sbr.rel (%p285) target = $region40
        $region39: #{tpu_custom_call.1} parent=35 // pred_region
          %288 = dma.done %s281, 512
        $region40: #{tpu_custom_call.1} parent=35 // pred_fallthru
          _
        %s289 = sand.u32 %s24, 1
        %s290 = scalar_lea.sflag [#allocation10], %s289
        %s291 = sand.u32 %s81, 1
        %s292 = smul.addr %s291, 32
        %s293 = scalar_lea.vmem [#allocation9], %s292
        // Predicated region
        $region41: #{tpu_custom_call.1} parent=35 // pred_check
          %p294 = pneg %p94
        $region42: #{tpu_custom_call.1} parent=35 // pred_check_branch
          %296 = sbr.rel (%p294) target = $region44
        $region43: #{tpu_custom_call.1} parent=35 // pred_region
          %297 = dma.done %s290, 512
        $region44: #{tpu_custom_call.1} parent=35 // pred_fallthru
          _
        %s298 = sand.u32 %s24, 1
        %s299 = scalar_lea.sflag [#allocation10], %s298
        %s300 = sand.u32 %s109, 1
        %s301 = smul.addr %s300, 32
        %s302 = scalar_lea.vmem [#allocation11], %s301
        // Predicated region
        $region45: #{tpu_custom_call.1} parent=35 // pred_check
          %p303 = pneg %p122
        $region46: #{tpu_custom_call.1} parent=35 // pred_check_branch
          %305 = sbr.rel (%p303) target = $region48
        $region47: #{tpu_custom_call.1} parent=35 // pred_region
          %306 = dma.done %s299, 512
        $region48: #{tpu_custom_call.1} parent=35 // pred_fallthru
          _
        %s307 = sand.u32 %s53, 1
        %s308 = scalar_lea.sflag [#allocation7], %s307
        %s309 = sand.u32 %s53, 1
        %s310 = smul.addr %s309, 32
        %s311 = scalar_lea.vmem [#allocation6], %s310
        %p312 = pneg %p66
        %p313 = pneg %p63
        %s314 = sand.u32 %s24, 1
        %s315 = scalar_lea.sflag [#allocation10], %s314
        %s316 = sand.u32 %s81, 1
        %s317 = smul.addr %s316, 32
        %s318 = scalar_lea.vmem [#allocation9], %s317
        %p319 = pneg %p94
        %p320 = pneg %p91
        %s321 = sand.u32 %s24, 1
        %s322 = scalar_lea.sflag [#allocation10], %s321
        %s323 = sand.u32 %s109, 1
        %s324 = smul.addr %s323, 32
        %s325 = scalar_lea.vmem [#allocation11], %s324
        %p326 = pneg %p122
        %p327 = pneg %p119
        %p328 = scmp.lt.s32.totalorder %s30, 0
        %s329 = scalar_select %p328, %s30, 0
        %p330 = scmp.lt.s32.totalorder %s31, 0
        %s331 = scalar_select %p330, %s31, 0
        %s332 = sadd.s32 %s331, %s329
        %s333 = smul.addr %s332, 2
        %s334 = scalar_lea.vmem %s3, %s333
        %p335 = pneg %p150
        %p336 = pneg %p147
        %p337 = pneg %p178
        %p338 = pneg %p175
        %s339 = sand.u32 %s165, 1
        %s340 = scalar_lea.sflag [#allocation8], %s339
        %s341 = sand.u32 %s165, 1
        %s342 = smul.addr %s341, 32
        %s343 = scalar_lea.vmem [#allocation12], %s342
        %s344 = smul.u32 4, %s29
        %s345 = smul.u32 4, %s29
        %s346 = smul.u32 4, %s29
        %p347 = scmp.lt.s32.totalorder %s30, 0
        %s348 = scalar_select %p347, %s30, 0
        %p349 = scmp.lt.s32.totalorder %s31, 0
        %s350 = scalar_select %p349, %s31, 0
        %s351 = sadd.s32 %s350, %s348
        %s352 = smul.addr %s351, 2
        %s353 = scalar_lea.vmem %s3, %s352
        %s354 = smul.u32 4, %s29
        %p357 = scmp.eq.s32.totalorder %s31, 0
        // Predicated region
        $region49: #{tpu_custom_call.1} parent=35 // pred_check
          %p358 = pneg %p357
        $region50: #{tpu_custom_call.1} parent=35 // pred_check_branch
          %360 = sbr.rel (%p358) target = $region52
        $region51: #{tpu_custom_call.1} parent=35 // pred_region
          %361 = vst [vmem:[#allocation2] sm:$0xff] -inf
          %362 = vst [vmem:[#allocation2 + $0x8] sm:$0xff] -inf
          %363 = vst [vmem:[#allocation2 + $0x10] sm:$0xff] -inf
          %364 = vst [vmem:[#allocation2 + $0x18] sm:$0xff] -inf
          %365 = vst [vmem:[#allocation3] sm:$0xff] 0.0
          %366 = vst [vmem:[#allocation3 + $0x8] sm:$0xff] 0.0
          %367 = vst [vmem:[#allocation3 + $0x10] sm:$0xff] 0.0
          %368 = vst [vmem:[#allocation3 + $0x18] sm:$0xff] 0.0
          %vm369 = vcmask 261120
          %370 = vst.msk [vmem:[#allocation4] sm:$0xff] %vm369, 0.0
          %371 = vst.msk [vmem:[#allocation4 + $0x8] sm:$0xff] %vm369, 0.0
          %372 = vst.msk [vmem:[#allocation4 + $0x10] sm:$0xff] %vm369, 0.0
          %373 = vst.msk [vmem:[#allocation4 + $0x18] sm:$0xff] %vm369, 0.0
          %v374 = vld [vmem:[%s284] sm:$0xff]
          %v375 = vld [vmem:[%s284 + $0x8] sm:$0xff]
          %v376 = vld [vmem:[%s284 + $0x10] sm:$0xff]
          %v377 = vld [vmem:[%s284 + $0x18] sm:$0xff]
          %v378 = vmul.f32 %v374, 0.5
          %v379 = vmul.f32 %v375, 0.5
          %v380 = vmul.f32 %v376, 0.5
          %v381 = vmul.f32 %v377, 0.5
          %382 = vst.msk [vmem:[#allocation5] sm:$0xff] %vm369, %v378
          %383 = vst.msk [vmem:[#allocation5 + $0x8] sm:$0xff] %vm369, %v379
          %384 = vst.msk [vmem:[#allocation5 + $0x10] sm:$0xff] %vm369, %v380
          %385 = vst.msk [vmem:[#allocation5 + $0x18] sm:$0xff] %vm369, %v381
        $region52: #{tpu_custom_call.1} parent=35 // pred_fallthru
          _
        %v386 = vld [vmem:[#allocation5] sm:$0xff]
        %v387 = vld [vmem:[#allocation5 + $0x8] sm:$0xff]
        %v388 = vld [vmem:[#allocation5 + $0x10] sm:$0xff]
        %v389 = vld [vmem:[#allocation5 + $0x18] sm:$0xff]
        %v390 = vld [vmem:[%s293] sm:$0xff]
        %v391 = vld [vmem:[%s293 + $0x8] sm:$0xff]
        %v392 = vld [vmem:[%s293 + $0x10] sm:$0xff]
        %v393 = vld [vmem:[%s293 + $0x18] sm:$0xff]
        %vm394 = vcmask 261120
        %v396 = vsel %vm394, %v386, 0
        %v399 = vsel %vm394, %v390, 0
        %401 = vmatprep.subr.mxu0 0.0
        %402 = vmatpush1.xpose.msra.mxu0 %v399
        %403 = vmatprep.subr.mxu0 0.0
        %404 = vmatpush1.xpose.msra.mxu0 0.0
        %405 = vmatprep.subr.mxu0 0.0
        %406 = vmatpush1.xpose.msra.mxu0 0.0
        %407 = vmatprep.subr.mxu0 0.0
        %408 = vmatpush1.xpose.msra.mxu0 0.0
        %409 = vmatprep.subr.mxu0 0.0
        %410 = vmatpush1.xpose.msra.mxu0 0.0
        %411 = vmatprep.subr.mxu0 0.0
        %412 = vmatpush1.xpose.msra.mxu0 0.0
        %413 = vmatprep.subr.mxu0 0.0
        %414 = vmatpush1.xpose.msra.mxu0 0.0
        %415 = vmatprep.subr.mxu0 0.0
        %416 = vmatpush1.xpose.msra.mxu0 0.0
        %417 = vmatprep.subr.mxu0 0.0
        %418 = vmatpush1.xpose.msra.mxu0 0.0
        %419 = vmatprep.subr.mxu0 0.0
        %420 = vmatpush1.xpose.msra.mxu0 0.0
        %421 = vmatprep.subr.mxu0 0.0
        %422 = vmatpush1.xpose.msra.mxu0 0.0
        %423 = vmatprep.subr.mxu0 0.0
        %424 = vmatpush1.xpose.msra.mxu0 0.0
        %425 = vmatprep.subr.mxu0 0.0
        %426 = vmatpush1.xpose.msra.mxu0 0.0
        %427 = vmatprep.subr.mxu0 0.0
        %428 = vmatpush1.xpose.msra.mxu0 0.0
        %429 = vmatprep.subr.mxu0 0.0
        %430 = vmatpush1.xpose.msra.mxu0 0.0
        %431 = vmatprep.subr.mxu0 0.0
        %432 = vmatpush1.xpose.msra.mxu0 0.0
        %433 = vmatprep.subr.mxu0 0.0
        %434 = vmatpush1.xpose.msra.mxu0 0.0
        %435 = vmatprep.subr.mxu0 0.0
        %436 = vmatpush1.xpose.msra.mxu0 0.0
        %437 = vmatprep.subr.mxu0 0.0
        %438 = vmatpush1.xpose.msra.mxu0 0.0
        %439 = vmatprep.subr.mxu0 0.0
        %440 = vmatpush1.xpose.msra.mxu0 0.0
        %441 = vmatprep.subr.mxu0 0.0
        %442 = vmatpush1.xpose.msra.mxu0 0.0
        %443 = vmatprep.subr.mxu0 0.0
        %444 = vmatpush1.xpose.msra.mxu0 0.0
        %445 = vmatprep.subr.mxu0 0.0
        %446 = vmatpush1.xpose.msra.mxu0 0.0
        %447 = vmatprep.subr.mxu0 0.0
        %448 = vmatpush1.xpose.msra.mxu0 0.0
        %449 = vmatprep.subr.mxu0 0.0
        %450 = vmatpush1.xpose.msra.mxu0 0.0
        %451 = vmatprep.subr.mxu0 0.0
        %452 = vmatpush1.xpose.msra.mxu0 0.0
        %453 = vmatprep.subr.mxu0 0.0
        %454 = vmatpush1.xpose.msra.mxu0 0.0
        %455 = vmatprep.subr.mxu0 0.0
        %456 = vmatpush1.xpose.msra.mxu0 0.0
        %457 = vmatprep.subr.mxu0 0.0
        %458 = vmatpush1.xpose.msra.mxu0 0.0
        %459 = vmatprep.subr.mxu0 0.0
        %460 = vmatpush1.xpose.msra.mxu0 0.0
        %461 = vmatprep.subr.mxu0 0.0
        %462 = vmatpush1.xpose.msra.mxu0 0.0
        %463 = vmatprep.subr.mxu0 0.0
        %464 = vmatpush1.xpose.msra.mxu0 0.0
        %465 = vmatprep.mubr.f32.mxu0 0.0
        %466 = vmatmul.mubr.f32.gmra.mrb[0].mxu0 %v396
        %v467 = vpop.f32.mrb[0].mxu0
        %v468 = vadd.f32 0.0, %v467
        %v469 = vpop.f32.mrb[0].mxu0
        %470 = vdwg.mxu0
        %v472 = vsel %vm394, %v387, 0
        %v475 = vsel %vm394, %v391, 0
        %477 = vmatprep.subr.mxu0 0.0
        %478 = vmatpush1.xpose.msra.mxu0 %v475
        %479 = vmatprep.subr.mxu0 0.0
        %480 = vmatpush1.xpose.msra.mxu0 0.0
        %481 = vmatprep.subr.mxu0 0.0
        %482 = vmatpush1.xpose.msra.mxu0 0.0
        %483 = vmatprep.subr.mxu0 0.0
        %484 = vmatpush1.xpose.msra.mxu0 0.0
        %485 = vmatprep.subr.mxu0 0.0
        %486 = vmatpush1.xpose.msra.mxu0 0.0
        %487 = vmatprep.subr.mxu0 0.0
        %488 = vmatpush1.xpose.msra.mxu0 0.0
        %489 = vmatprep.subr.mxu0 0.0
        %490 = vmatpush1.xpose.msra.mxu0 0.0
        %491 = vmatprep.subr.mxu0 0.0
        %492 = vmatpush1.xpose.msra.mxu0 0.0
        %493 = vmatprep.subr.mxu0 0.0
        %494 = vmatpush1.xpose.msra.mxu0 0.0
        %495 = vmatprep.subr.mxu0 0.0
        %496 = vmatpush1.xpose.msra.mxu0 0.0
        %497 = vmatprep.subr.mxu0 0.0
        %498 = vmatpush1.xpose.msra.mxu0 0.0
        %499 = vmatprep.subr.mxu0 0.0
        %500 = vmatpush1.xpose.msra.mxu0 0.0
        %501 = vmatprep.subr.mxu0 0.0
        %502 = vmatpush1.xpose.msra.mxu0 0.0
        %503 = vmatprep.subr.mxu0 0.0
        %504 = vmatpush1.xpose.msra.mxu0 0.0
        %505 = vmatprep.subr.mxu0 0.0
        %506 = vmatpush1.xpose.msra.mxu0 0.0
        %507 = vmatprep.subr.mxu0 0.0
        %508 = vmatpush1.xpose.msra.mxu0 0.0
        %509 = vmatprep.subr.mxu0 0.0
        %510 = vmatpush1.xpose.msra.mxu0 0.0
        %511 = vmatprep.subr.mxu0 0.0
        %512 = vmatpush1.xpose.msra.mxu0 0.0
        %513 = vmatprep.subr.mxu0 0.0
        %514 = vmatpush1.xpose.msra.mxu0 0.0
        %515 = vmatprep.subr.mxu0 0.0
        %516 = vmatpush1.xpose.msra.mxu0 0.0
        %517 = vmatprep.subr.mxu0 0.0
        %518 = vmatpush1.xpose.msra.mxu0 0.0
        %519 = vmatprep.subr.mxu0 0.0
        %520 = vmatpush1.xpose.msra.mxu0 0.0
        %521 = vmatprep.subr.mxu0 0.0
        %522 = vmatpush1.xpose.msra.mxu0 0.0
        %523 = vmatprep.subr.mxu0 0.0
        %524 = vmatpush1.xpose.msra.mxu0 0.0
        %525 = vmatprep.subr.mxu0 0.0
        %526 = vmatpush1.xpose.msra.mxu0 0.0
        %527 = vmatprep.subr.mxu0 0.0
        %528 = vmatpush1.xpose.msra.mxu0 0.0
        %529 = vmatprep.subr.mxu0 0.0
        %530 = vmatpush1.xpose.msra.mxu0 0.0
        %531 = vmatprep.subr.mxu0 0.0
        %532 = vmatpush1.xpose.msra.mxu0 0.0
        %533 = vmatprep.subr.mxu0 0.0
        %534 = vmatpush1.xpose.msra.mxu0 0.0
        %535 = vmatprep.subr.mxu0 0.0
        %536 = vmatpush1.xpose.msra.mxu0 0.0
        %537 = vmatprep.subr.mxu0 0.0
        %538 = vmatpush1.xpose.msra.mxu0 0.0
        %539 = vmatprep.subr.mxu0 0.0
        %540 = vmatpush1.xpose.msra.mxu0 0.0
        %541 = vmatprep.mubr.f32.mxu0 0.0
        %542 = vmatmul.mubr.f32.gmra.mrb[0].mxu0 %v472
        %v543 = vpop.f32.mrb[0].mxu0
        %v544 = vadd.f32 0.0, %v543
        %v545 = vpop.f32.mrb[0].mxu0
        %546 = vdwg.mxu0
        %v548 = vsel %vm394, %v388, 0
        %v551 = vsel %vm394, %v392, 0
        %553 = vmatprep.subr.mxu0 0.0
        %554 = vmatpush1.xpose.msra.mxu0 %v551
        %555 = vmatprep.subr.mxu0 0.0
        %556 = vmatpush1.xpose.msra.mxu0 0.0
        %557 = vmatprep.subr.mxu0 0.0
        %558 = vmatpush1.xpose.msra.mxu0 0.0
        %559 = vmatprep.subr.mxu0 0.0
        %560 = vmatpush1.xpose.msra.mxu0 0.0
        %561 = vmatprep.subr.mxu0 0.0
        %562 = vmatpush1.xpose.msra.mxu0 0.0
        %563 = vmatprep.subr.mxu0 0.0
        %564 = vmatpush1.xpose.msra.mxu0 0.0
        %565 = vmatprep.subr.mxu0 0.0
        %566 = vmatpush1.xpose.msra.mxu0 0.0
        %567 = vmatprep.subr.mxu0 0.0
        %568 = vmatpush1.xpose.msra.mxu0 0.0
        %569 = vmatprep.subr.mxu0 0.0
        %570 = vmatpush1.xpose.msra.mxu0 0.0
        %571 = vmatprep.subr.mxu0 0.0
        %572 = vmatpush1.xpose.msra.mxu0 0.0
        %573 = vmatprep.subr.mxu0 0.0
        %574 = vmatpush1.xpose.msra.mxu0 0.0
        %575 = vmatprep.subr.mxu0 0.0
        %576 = vmatpush1.xpose.msra.mxu0 0.0
        %577 = vmatprep.subr.mxu0 0.0
        %578 = vmatpush1.xpose.msra.mxu0 0.0
        %579 = vmatprep.subr.mxu0 0.0
        %580 = vmatpush1.xpose.msra.mxu0 0.0
        %581 = vmatprep.subr.mxu0 0.0
        %582 = vmatpush1.xpose.msra.mxu0 0.0
        %583 = vmatprep.subr.mxu0 0.0
        %584 = vmatpush1.xpose.msra.mxu0 0.0
        %585 = vmatprep.subr.mxu0 0.0
        %586 = vmatpush1.xpose.msra.mxu0 0.0
        %587 = vmatprep.subr.mxu0 0.0
        %588 = vmatpush1.xpose.msra.mxu0 0.0
        %589 = vmatprep.subr.mxu0 0.0
        %590 = vmatpush1.xpose.msra.mxu0 0.0
        %591 = vmatprep.subr.mxu0 0.0
        %592 = vmatpush1.xpose.msra.mxu0 0.0
        %593 = vmatprep.subr.mxu0 0.0
        %594 = vmatpush1.xpose.msra.mxu0 0.0
        %595 = vmatprep.subr.mxu0 0.0
        %596 = vmatpush1.xpose.msra.mxu0 0.0
        %597 = vmatprep.subr.mxu0 0.0
        %598 = vmatpush1.xpose.msra.mxu0 0.0
        %599 = vmatprep.subr.mxu0 0.0
        %600 = vmatpush1.xpose.msra.mxu0 0.0
        %601 = vmatprep.subr.mxu0 0.0
        %602 = vmatpush1.xpose.msra.mxu0 0.0
        %603 = vmatprep.subr.mxu0 0.0
        %604 = vmatpush1.xpose.msra.mxu0 0.0
        %605 = vmatprep.subr.mxu0 0.0
        %606 = vmatpush1.xpose.msra.mxu0 0.0
        %607 = vmatprep.subr.mxu0 0.0
        %608 = vmatpush1.xpose.msra.mxu0 0.0
        %609 = vmatprep.subr.mxu0 0.0
        %610 = vmatpush1.xpose.msra.mxu0 0.0
        %611 = vmatprep.subr.mxu0 0.0
        %612 = vmatpush1.xpose.msra.mxu0 0.0
        %613 = vmatprep.subr.mxu0 0.0
        %614 = vmatpush1.xpose.msra.mxu0 0.0
        %615 = vmatprep.subr.mxu0 0.0
        %616 = vmatpush1.xpose.msra.mxu0 0.0
        %617 = vmatprep.mubr.f32.mxu0 0.0
        %618 = vmatmul.mubr.f32.gmra.mrb[0].mxu0 %v548
        %v619 = vpop.f32.mrb[0].mxu0
        %v620 = vadd.f32 0.0, %v619
        %v621 = vpop.f32.mrb[0].mxu0
        %622 = vdwg.mxu0
        %v624 = vsel %vm394, %v389, 0
        %v627 = vsel %vm394, %v393, 0
        %629 = vmatprep.subr.mxu0 0.0
        %630 = vmatpush1.xpose.msra.mxu0 %v627
        %631 = vmatprep.subr.mxu0 0.0
        %632 = vmatpush1.xpose.msra.mxu0 0.0
        %633 = vmatprep.subr.mxu0 0.0
        %634 = vmatpush1.xpose.msra.mxu0 0.0
        %635 = vmatprep.subr.mxu0 0.0
        %636 = vmatpush1.xpose.msra.mxu0 0.0
        %637 = vmatprep.subr.mxu0 0.0
        %638 = vmatpush1.xpose.msra.mxu0 0.0
        %639 = vmatprep.subr.mxu0 0.0
        %640 = vmatpush1.xpose.msra.mxu0 0.0
        %641 = vmatprep.subr.mxu0 0.0
        %642 = vmatpush1.xpose.msra.mxu0 0.0
        %643 = vmatprep.subr.mxu0 0.0
        %644 = vmatpush1.xpose.msra.mxu0 0.0
        %645 = vmatprep.subr.mxu0 0.0
        %646 = vmatpush1.xpose.msra.mxu0 0.0
        %647 = vmatprep.subr.mxu0 0.0
        %648 = vmatpush1.xpose.msra.mxu0 0.0
        %649 = vmatprep.subr.mxu0 0.0
        %650 = vmatpush1.xpose.msra.mxu0 0.0
        %651 = vmatprep.subr.mxu0 0.0
        %652 = vmatpush1.xpose.msra.mxu0 0.0
        %653 = vmatprep.subr.mxu0 0.0
        %654 = vmatpush1.xpose.msra.mxu0 0.0
        %655 = vmatprep.subr.mxu0 0.0
        %656 = vmatpush1.xpose.msra.mxu0 0.0
        %657 = vmatprep.subr.mxu0 0.0
        %658 = vmatpush1.xpose.msra.mxu0 0.0
        %659 = vmatprep.subr.mxu0 0.0
        %660 = vmatpush1.xpose.msra.mxu0 0.0
        %661 = vmatprep.subr.mxu0 0.0
        %662 = vmatpush1.xpose.msra.mxu0 0.0
        %663 = vmatprep.subr.mxu0 0.0
        %664 = vmatpush1.xpose.msra.mxu0 0.0
        %665 = vmatprep.subr.mxu0 0.0
        %666 = vmatpush1.xpose.msra.mxu0 0.0
        %667 = vmatprep.subr.mxu0 0.0
        %668 = vmatpush1.xpose.msra.mxu0 0.0
        %669 = vmatprep.subr.mxu0 0.0
        %670 = vmatpush1.xpose.msra.mxu0 0.0
        %671 = vmatprep.subr.mxu0 0.0
        %672 = vmatpush1.xpose.msra.mxu0 0.0
        %673 = vmatprep.subr.mxu0 0.0
        %674 = vmatpush1.xpose.msra.mxu0 0.0
        %675 = vmatprep.subr.mxu0 0.0
        %676 = vmatpush1.xpose.msra.mxu0 0.0
        %677 = vmatprep.subr.mxu0 0.0
        %678 = vmatpush1.xpose.msra.mxu0 0.0
        %679 = vmatprep.subr.mxu0 0.0
        %680 = vmatpush1.xpose.msra.mxu0 0.0
        %681 = vmatprep.subr.mxu0 0.0
        %682 = vmatpush1.xpose.msra.mxu0 0.0
        %683 = vmatprep.subr.mxu0 0.0
        %684 = vmatpush1.xpose.msra.mxu0 0.0
        %685 = vmatprep.subr.mxu0 0.0
        %686 = vmatpush1.xpose.msra.mxu0 0.0
        %687 = vmatprep.subr.mxu0 0.0
        %688 = vmatpush1.xpose.msra.mxu0 0.0
        %689 = vmatprep.subr.mxu0 0.0
        %690 = vmatpush1.xpose.msra.mxu0 0.0
        %691 = vmatprep.subr.mxu0 0.0
        %692 = vmatpush1.xpose.msra.mxu0 0.0
        %693 = vmatprep.mubr.f32.mxu0 0.0
        %694 = vmatmul.mubr.f32.gmra.mrb[0].mxu0 %v624
        %v695 = vpop.f32.mrb[0].mxu0
        %v696 = vadd.f32 0.0, %v695
        %v697 = vpop.f32.mrb[0].mxu0
        %698 = vdwg.mxu0
        %v699 = vld [vmem:[%s353] sm:$0x3]
        %vm700 = vnez %v699
        %v701 = vsel %vm700, 16843009, 0
        %v702 = vunpack.c.0.s8 %v701
        %vm703 = vcmp.ne.s32.totalorder %v702, 0
        %v704 = vsel %vm703, 1, 0
        %vm705 = vcmp.eq.s32.totalorder %v704, 1
        %v706 = vsel %vm705, -3.4028235e+38, %v468
        %v707 = vsel %vm705, -3.4028235e+38, %v544
        %v708 = vsel %vm705, -3.4028235e+38, %v620
        %v709 = vsel %vm705, -3.4028235e+38, %v696
        %v710 = vld [vmem:[#allocation2] sm:$0xff]
        %v711 = vld [vmem:[#allocation2 + $0x8] sm:$0xff]
        %v712 = vld [vmem:[#allocation2 + $0x10] sm:$0xff]
        %v713 = vld [vmem:[#allocation2 + $0x18] sm:$0xff]
        %vm714 = vcmask 64512
        %v715 = vsel %vm714, %v706, -inf
        %716 = vmax.xlane.f32.xlu0 %v715
        %v717 = vpop.xlane.xlu0 %716
        %v718 = vsel %vm714, %v707, -inf
        %719 = vmax.xlane.f32.xlu0 %v718
        %v720 = vpop.xlane.xlu0 %719
        %v721 = vsel %vm714, %v708, -inf
        %722 = vmax.xlane.f32.xlu0 %v721
        %v723 = vpop.xlane.xlu0 %722
        %v724 = vsel %vm714, %v709, -inf
        %725 = vmax.xlane.f32.xlu0 %v724
        %v726 = vpop.xlane.xlu0 %725
        %v727 = vmax.f32 %v710, %v717
        %v728 = vmax.f32 %v711, %v720
        %v729 = vmax.f32 %v712, %v723
        %v730 = vmax.f32 %v713, %v726
        %v731 = vsub.f32 %v710, %v727
        %v732 = vsub.f32 %v711, %v728
        %v733 = vsub.f32 %v712, %v729
        %v734 = vsub.f32 %v713, %v730
        %v735 = vmul.f32 %v731, 1.442695
        %v736 = vpow.pop %v735
        %v737 = vmul.f32 %v732, 1.442695
        %v738 = vpow.pop %v737
        %v739 = vmul.f32 %v733, 1.442695
        %v740 = vpow.pop %v739
        %v741 = vmul.f32 %v734, 1.442695
        %v742 = vpow.pop %v741
        %744 = vset.pattern.permute.xlu0 0
        %745 = vperm.xlu0 %744, %v727
        %v746 = vpop.permute.xlu0 %745
        %749 = vset.pattern.permute.xlu0 0
        %750 = vperm.xlu0 %749, %v728
        %v751 = vpop.permute.xlu0 %750
        %754 = vset.pattern.permute.xlu0 0
        %755 = vperm.xlu0 %754, %v729
        %v756 = vpop.permute.xlu0 %755
        %759 = vset.pattern.permute.xlu0 0
        %760 = vperm.xlu0 %759, %v730
        %v761 = vpop.permute.xlu0 %760
        %v763 = vsub.f32 %v706, %v746
        %v764 = vsub.f32 %v707, %v751
        %v765 = vsub.f32 %v708, %v756
        %v766 = vsub.f32 %v709, %v761
        %v767 = vmul.f32 %v763, 1.442695
        %v768 = vpow.pop %v767
        %v769 = vmul.f32 %v764, 1.442695
        %v770 = vpow.pop %v769
        %v771 = vmul.f32 %v765, 1.442695
        %v772 = vpow.pop %v771
        %v773 = vmul.f32 %v766, 1.442695
        %v774 = vpow.pop %v773
        %v775 = vld [vmem:[#allocation3] sm:$0xff]
        %v776 = vld [vmem:[#allocation3 + $0x8] sm:$0xff]
        %v777 = vld [vmem:[#allocation3 + $0x10] sm:$0xff]
        %v778 = vld [vmem:[#allocation3 + $0x18] sm:$0xff]
        %v779 = vmul.f32 %v736, %v775
        %v780 = vmul.f32 %v738, %v776
        %v781 = vmul.f32 %v740, %v777
        %v782 = vmul.f32 %v742, %v778
        %v783 = vsel %vm714, %v768, 0.0
        %784 = vadd.xlane.f32.xlu0 %v783
        %v785 = vpop.xlane.xlu0 %784
        %v786 = vsel %vm714, %v770, 0.0
        %787 = vadd.xlane.f32.xlu0 %v786
        %v788 = vpop.xlane.xlu0 %787
        %v789 = vsel %vm714, %v772, 0.0
        %790 = vadd.xlane.f32.xlu0 %v789
        %v791 = vpop.xlane.xlu0 %790
        %v792 = vsel %vm714, %v774, 0.0
        %793 = vadd.xlane.f32.xlu0 %v792
        %v794 = vpop.xlane.xlu0 %793
        %v795 = vadd.f32 %v779, %v785
        %v796 = vadd.f32 %v780, %v788
        %v797 = vadd.f32 %v781, %v791
        %v798 = vadd.f32 %v782, %v794
        %799 = vst [vmem:[#allocation3] sm:$0xff] %v795
        %800 = vst [vmem:[#allocation3 + $0x8] sm:$0xff] %v796
        %801 = vst [vmem:[#allocation3 + $0x10] sm:$0xff] %v797
        %802 = vst [vmem:[#allocation3 + $0x18] sm:$0xff] %v798
        %v803 = vld [vmem:[#allocation4] sm:$0xff]
        %v804 = vld [vmem:[#allocation4 + $0x8] sm:$0xff]
        %v805 = vld [vmem:[#allocation4 + $0x10] sm:$0xff]
        %v806 = vld [vmem:[#allocation4 + $0x18] sm:$0xff]
        %808 = vset.pattern.permute.xlu0 0
        %809 = vperm.xlu0 %808, %v736
        %v810 = vpop.permute.xlu0 %809
        %813 = vset.pattern.permute.xlu0 0
        %814 = vperm.xlu0 %813, %v738
        %v815 = vpop.permute.xlu0 %814
        %818 = vset.pattern.permute.xlu0 0
        %819 = vperm.xlu0 %818, %v740
        %v820 = vpop.permute.xlu0 %819
        %823 = vset.pattern.permute.xlu0 0
        %824 = vperm.xlu0 %823, %v742
        %v825 = vpop.permute.xlu0 %824
        %v827 = vmul.f32 %v810, %v803
        %v828 = vmul.f32 %v815, %v804
        %v829 = vmul.f32 %v820, %v805
        %v830 = vmul.f32 %v825, %v806
        %v831 = vld [vmem:[%s302] sm:$0xff]
        %v832 = vld [vmem:[%s302 + $0x8] sm:$0xff]
        %v833 = vld [vmem:[%s302 + $0x10] sm:$0xff]
        %v834 = vld [vmem:[%s302 + $0x18] sm:$0xff]
        %v836 = vsel %vm714, %v768, 0
        %838 = vmatprep.subr.mxu0 0.0
        %839 = vmatpush1.msra.mxu0 %v831
        %840 = vmatprep.subr.mxu0 0.0
        %841 = vmatpush1.msra.mxu0 0.0
        %842 = vmatprep.subr.mxu0 0.0
        %843 = vmatpush1.msra.mxu0 0.0
        %844 = vmatprep.subr.mxu0 0.0
        %845 = vmatpush1.msra.mxu0 0.0
        %846 = vmatprep.subr.mxu0 0.0
        %847 = vmatpush1.msra.mxu0 0.0
        %848 = vmatprep.subr.mxu0 0.0
        %849 = vmatpush1.msra.mxu0 0.0
        %850 = vmatprep.subr.mxu0 0.0
        %851 = vmatpush1.msra.mxu0 0.0
        %852 = vmatprep.subr.mxu0 0.0
        %853 = vmatpush1.msra.mxu0 0.0
        %854 = vmatprep.subr.mxu0 0.0
        %855 = vmatpush1.msra.mxu0 0.0
        %856 = vmatprep.subr.mxu0 0.0
        %857 = vmatpush1.msra.mxu0 0.0
        %858 = vmatprep.subr.mxu0 0.0
        %859 = vmatpush1.msra.mxu0 0.0
        %860 = vmatprep.subr.mxu0 0.0
        %861 = vmatpush1.msra.mxu0 0.0
        %862 = vmatprep.subr.mxu0 0.0
        %863 = vmatpush1.msra.mxu0 0.0
        %864 = vmatprep.subr.mxu0 0.0
        %865 = vmatpush1.msra.mxu0 0.0
        %866 = vmatprep.subr.mxu0 0.0
        %867 = vmatpush1.msra.mxu0 0.0
        %868 = vmatprep.subr.mxu0 0.0
        %869 = vmatpush1.msra.mxu0 0.0
        %870 = vmatprep.subr.mxu0 0.0
        %871 = vmatpush1.msra.mxu0 0.0
        %872 = vmatprep.subr.mxu0 0.0
        %873 = vmatpush1.msra.mxu0 0.0
        %874 = vmatprep.subr.mxu0 0.0
        %875 = vmatpush1.msra.mxu0 0.0
        %876 = vmatprep.subr.mxu0 0.0
        %877 = vmatpush1.msra.mxu0 0.0
        %878 = vmatprep.subr.mxu0 0.0
        %879 = vmatpush1.msra.mxu0 0.0
        %880 = vmatprep.subr.mxu0 0.0
        %881 = vmatpush1.msra.mxu0 0.0
        %882 = vmatprep.subr.mxu0 0.0
        %883 = vmatpush1.msra.mxu0 0.0
        %884 = vmatprep.subr.mxu0 0.0
        %885 = vmatpush1.msra.mxu0 0.0
        %886 = vmatprep.subr.mxu0 0.0
        %887 = vmatpush1.msra.mxu0 0.0
        %888 = vmatprep.subr.mxu0 0.0
        %889 = vmatpush1.msra.mxu0 0.0
        %890 = vmatprep.subr.mxu0 0.0
        %891 = vmatpush1.msra.mxu0 0.0
        %892 = vmatprep.subr.mxu0 0.0
        %893 = vmatpush1.msra.mxu0 0.0
        %894 = vmatprep.subr.mxu0 0.0
        %895 = vmatpush1.msra.mxu0 0.0
        %896 = vmatprep.subr.mxu0 0.0
        %897 = vmatpush1.msra.mxu0 0.0
        %898 = vmatprep.subr.mxu0 0.0
        %899 = vmatpush1.msra.mxu0 0.0
        %900 = vmatprep.subr.mxu0 0.0
        %901 = vmatpush1.msra.mxu0 0.0
        %902 = vmatprep.mubr.f32.mxu0 0.0
        %903 = vmatmul.mubr.f32.gmra.mrb[0].mxu0 %v836
        %v904 = vpop.f32.mrb[0].mxu0
        %v905 = vadd.f32 0.0, %v904
        %v906 = vpop.f32.mrb[0].mxu0
        %907 = vdwg.mxu0
        %v909 = vsel %vm714, %v770, 0
        %911 = vmatprep.subr.mxu0 0.0
        %912 = vmatpush1.msra.mxu0 %v832
        %913 = vmatprep.subr.mxu0 0.0
        %914 = vmatpush1.msra.mxu0 0.0
        %915 = vmatprep.subr.mxu0 0.0
        %916 = vmatpush1.msra.mxu0 0.0
        %917 = vmatprep.subr.mxu0 0.0
        %918 = vmatpush1.msra.mxu0 0.0
        %919 = vmatprep.subr.mxu0 0.0
        %920 = vmatpush1.msra.mxu0 0.0
        %921 = vmatprep.subr.mxu0 0.0
        %922 = vmatpush1.msra.mxu0 0.0
        %923 = vmatprep.subr.mxu0 0.0
        %924 = vmatpush1.msra.mxu0 0.0
        %925 = vmatprep.subr.mxu0 0.0
        %926 = vmatpush1.msra.mxu0 0.0
        %927 = vmatprep.subr.mxu0 0.0
        %928 = vmatpush1.msra.mxu0 0.0
        %929 = vmatprep.subr.mxu0 0.0
        %930 = vmatpush1.msra.mxu0 0.0
        %931 = vmatprep.subr.mxu0 0.0
        %932 = vmatpush1.msra.mxu0 0.0
        %933 = vmatprep.subr.mxu0 0.0
        %934 = vmatpush1.msra.mxu0 0.0
        %935 = vmatprep.subr.mxu0 0.0
        %936 = vmatpush1.msra.mxu0 0.0
        %937 = vmatprep.subr.mxu0 0.0
        %938 = vmatpush1.msra.mxu0 0.0
        %939 = vmatprep.subr.mxu0 0.0
        %940 = vmatpush1.msra.mxu0 0.0
        %941 = vmatprep.subr.mxu0 0.0
        %942 = vmatpush1.msra.mxu0 0.0
        %943 = vmatprep.subr.mxu0 0.0
        %944 = vmatpush1.msra.mxu0 0.0
        %945 = vmatprep.subr.mxu0 0.0
        %946 = vmatpush1.msra.mxu0 0.0
        %947 = vmatprep.subr.mxu0 0.0
        %948 = vmatpush1.msra.mxu0 0.0
        %949 = vmatprep.subr.mxu0 0.0
        %950 = vmatpush1.msra.mxu0 0.0
        %951 = vmatprep.subr.mxu0 0.0
        %952 = vmatpush1.msra.mxu0 0.0
        %953 = vmatprep.subr.mxu0 0.0
        %954 = vmatpush1.msra.mxu0 0.0
        %955 = vmatprep.subr.mxu0 0.0
        %956 = vmatpush1.msra.mxu0 0.0
        %957 = vmatprep.subr.mxu0 0.0
        %958 = vmatpush1.msra.mxu0 0.0
        %959 = vmatprep.subr.mxu0 0.0
        %960 = vmatpush1.msra.mxu0 0.0
        %961 = vmatprep.subr.mxu0 0.0
        %962 = vmatpush1.msra.mxu0 0.0
        %963 = vmatprep.subr.mxu0 0.0
        %964 = vmatpush1.msra.mxu0 0.0
        %965 = vmatprep.subr.mxu0 0.0
        %966 = vmatpush1.msra.mxu0 0.0
        %967 = vmatprep.subr.mxu0 0.0
        %968 = vmatpush1.msra.mxu0 0.0
        %969 = vmatprep.subr.mxu0 0.0
        %970 = vmatpush1.msra.mxu0 0.0
        %971 = vmatprep.subr.mxu0 0.0
        %972 = vmatpush1.msra.mxu0 0.0
        %973 = vmatprep.subr.mxu0 0.0
        %974 = vmatpush1.msra.mxu0 0.0
        %975 = vmatprep.mubr.f32.mxu0 0.0
        %976 = vmatmul.mubr.f32.gmra.mrb[0].mxu0 %v909
        %v977 = vpop.f32.mrb[0].mxu0
        %v978 = vadd.f32 0.0, %v977
        %v979 = vpop.f32.mrb[0].mxu0
        %980 = vdwg.mxu0
        %v982 = vsel %vm714, %v772, 0
        %984 = vmatprep.subr.mxu0 0.0
        %985 = vmatpush1.msra.mxu0 %v833
        %986 = vmatprep.subr.mxu0 0.0
        %987 = vmatpush1.msra.mxu0 0.0
        %988 = vmatprep.subr.mxu0 0.0
        %989 = vmatpush1.msra.mxu0 0.0
        %990 = vmatprep.subr.mxu0 0.0
        %991 = vmatpush1.msra.mxu0 0.0
        %992 = vmatprep.subr.mxu0 0.0
        %993 = vmatpush1.msra.mxu0 0.0
        %994 = vmatprep.subr.mxu0 0.0
        %995 = vmatpush1.msra.mxu0 0.0
        %996 = vmatprep.subr.mxu0 0.0
        %997 = vmatpush1.msra.mxu0 0.0
        %998 = vmatprep.subr.mxu0 0.0
        %999 = vmatpush1.msra.mxu0 0.0
        %1000 = vmatprep.subr.mxu0 0.0
        %1001 = vmatpush1.msra.mxu0 0.0
        %1002 = vmatprep.subr.mxu0 0.0
        %1003 = vmatpush1.msra.mxu0 0.0
        %1004 = vmatprep.subr.mxu0 0.0
        %1005 = vmatpush1.msra.mxu0 0.0
        %1006 = vmatprep.subr.mxu0 0.0
        %1007 = vmatpush1.msra.mxu0 0.0
        %1008 = vmatprep.subr.mxu0 0.0
        %1009 = vmatpush1.msra.mxu0 0.0
        %1010 = vmatprep.subr.mxu0 0.0
        %1011 = vmatpush1.msra.mxu0 0.0
        %1012 = vmatprep.subr.mxu0 0.0
        %1013 = vmatpush1.msra.mxu0 0.0
        %1014 = vmatprep.subr.mxu0 0.0
        %1015 = vmatpush1.msra.mxu0 0.0
        %1016 = vmatprep.subr.mxu0 0.0
        %1017 = vmatpush1.msra.mxu0 0.0
        %1018 = vmatprep.subr.mxu0 0.0
        %1019 = vmatpush1.msra.mxu0 0.0
        %1020 = vmatprep.subr.mxu0 0.0
        %1021 = vmatpush1.msra.mxu0 0.0
        %1022 = vmatprep.subr.mxu0 0.0
        %1023 = vmatpush1.msra.mxu0 0.0
        %1024 = vmatprep.subr.mxu0 0.0
        %1025 = vmatpush1.msra.mxu0 0.0
        %1026 = vmatprep.subr.mxu0 0.0
        %1027 = vmatpush1.msra.mxu0 0.0
        %1028 = vmatprep.subr.mxu0 0.0
        %1029 = vmatpush1.msra.mxu0 0.0
        %1030 = vmatprep.subr.mxu0 0.0
        %1031 = vmatpush1.msra.mxu0 0.0
        %1032 = vmatprep.subr.mxu0 0.0
        %1033 = vmatpush1.msra.mxu0 0.0
        %1034 = vmatprep.subr.mxu0 0.0
        %1035 = vmatpush1.msra.mxu0 0.0
        %1036 = vmatprep.subr.mxu0 0.0
        %1037 = vmatpush1.msra.mxu0 0.0
        %1038 = vmatprep.subr.mxu0 0.0
        %1039 = vmatpush1.msra.mxu0 0.0
        %1040 = vmatprep.subr.mxu0 0.0
        %1041 = vmatpush1.msra.mxu0 0.0
        %1042 = vmatprep.subr.mxu0 0.0
        %1043 = vmatpush1.msra.mxu0 0.0
        %1044 = vmatprep.subr.mxu0 0.0
        %1045 = vmatpush1.msra.mxu0 0.0
        %1046 = vmatprep.subr.mxu0 0.0
        %1047 = vmatpush1.msra.mxu0 0.0
        %1048 = vmatprep.mubr.f32.mxu0 0.0
        %1049 = vmatmul.mubr.f32.gmra.mrb[0].mxu0 %v982
        %v1050 = vpop.f32.mrb[0].mxu0
        %v1051 = vadd.f32 0.0, %v1050
        %v1052 = vpop.f32.mrb[0].mxu0
        %1053 = vdwg.mxu0
        %v1055 = vsel %vm714, %v774, 0
        %1057 = vmatprep.subr.mxu0 0.0
        %1058 = vmatpush1.msra.mxu0 %v834
        %1059 = vmatprep.subr.mxu0 0.0
        %1060 = vmatpush1.msra.mxu0 0.0
        %1061 = vmatprep.subr.mxu0 0.0
        %1062 = vmatpush1.msra.mxu0 0.0
        %1063 = vmatprep.subr.mxu0 0.0
        %1064 = vmatpush1.msra.mxu0 0.0
        %1065 = vmatprep.subr.mxu0 0.0
        %1066 = vmatpush1.msra.mxu0 0.0
        %1067 = vmatprep.subr.mxu0 0.0
        %1068 = vmatpush1.msra.mxu0 0.0
        %1069 = vmatprep.subr.mxu0 0.0
        %1070 = vmatpush1.msra.mxu0 0.0
        %1071 = vmatprep.subr.mxu0 0.0
        %1072 = vmatpush1.msra.mxu0 0.0
        %1073 = vmatprep.subr.mxu0 0.0
        %1074 = vmatpush1.msra.mxu0 0.0
        %1075 = vmatprep.subr.mxu0 0.0
        %1076 = vmatpush1.msra.mxu0 0.0
        %1077 = vmatprep.subr.mxu0 0.0
        %1078 = vmatpush1.msra.mxu0 0.0
        %1079 = vmatprep.subr.mxu0 0.0
        %1080 = vmatpush1.msra.mxu0 0.0
        %1081 = vmatprep.subr.mxu0 0.0
        %1082 = vmatpush1.msra.mxu0 0.0
        %1083 = vmatprep.subr.mxu0 0.0
        %1084 = vmatpush1.msra.mxu0 0.0
        %1085 = vmatprep.subr.mxu0 0.0
        %1086 = vmatpush1.msra.mxu0 0.0
        %1087 = vmatprep.subr.mxu0 0.0
        %1088 = vmatpush1.msra.mxu0 0.0
        %1089 = vmatprep.subr.mxu0 0.0
        %1090 = vmatpush1.msra.mxu0 0.0
        %1091 = vmatprep.subr.mxu0 0.0
        %1092 = vmatpush1.msra.mxu0 0.0
        %1093 = vmatprep.subr.mxu0 0.0
        %1094 = vmatpush1.msra.mxu0 0.0
        %1095 = vmatprep.subr.mxu0 0.0
        %1096 = vmatpush1.msra.mxu0 0.0
        %1097 = vmatprep.subr.mxu0 0.0
        %1098 = vmatpush1.msra.mxu0 0.0
        %1099 = vmatprep.subr.mxu0 0.0
        %1100 = vmatpush1.msra.mxu0 0.0
        %1101 = vmatprep.subr.mxu0 0.0
        %1102 = vmatpush1.msra.mxu0 0.0
        %1103 = vmatprep.subr.mxu0 0.0
        %1104 = vmatpush1.msra.mxu0 0.0
        %1105 = vmatprep.subr.mxu0 0.0
        %1106 = vmatpush1.msra.mxu0 0.0
        %1107 = vmatprep.subr.mxu0 0.0
        %1108 = vmatpush1.msra.mxu0 0.0
        %1109 = vmatprep.subr.mxu0 0.0
        %1110 = vmatpush1.msra.mxu0 0.0
        %1111 = vmatprep.subr.mxu0 0.0
        %1112 = vmatpush1.msra.mxu0 0.0
        %1113 = vmatprep.subr.mxu0 0.0
        %1114 = vmatpush1.msra.mxu0 0.0
        %1115 = vmatprep.subr.mxu0 0.0
        %1116 = vmatpush1.msra.mxu0 0.0
        %1117 = vmatprep.subr.mxu0 0.0
        %1118 = vmatpush1.msra.mxu0 0.0
        %1119 = vmatprep.subr.mxu0 0.0
        %1120 = vmatpush1.msra.mxu0 0.0
        %1121 = vmatprep.mubr.f32.mxu0 0.0
        %1122 = vmatmul.mubr.f32.gmra.mrb[0].mxu0 %v1055
        %v1123 = vpop.f32.mrb[0].mxu0
        %v1124 = vadd.f32 0.0, %v1123
        %v1125 = vpop.f32.mrb[0].mxu0
        %1126 = vdwg.mxu0
        %v1127 = vadd.f32 %v827, %v905
        %v1128 = vadd.f32 %v828, %v978
        %v1129 = vadd.f32 %v829, %v1051
        %v1130 = vadd.f32 %v830, %v1124
        %1131 = vst.msk [vmem:[#allocation4] sm:$0xff] %vm394, %v1127
        %1132 = vst.msk [vmem:[#allocation4 + $0x8] sm:$0xff] %vm394, %v1128
        %1133 = vst.msk [vmem:[#allocation4 + $0x10] sm:$0xff] %vm394, %v1129
        %1134 = vst.msk [vmem:[#allocation4 + $0x18] sm:$0xff] %vm394, %v1130
        %1135 = vst [vmem:[#allocation2] sm:$0xff] %v727
        %1136 = vst [vmem:[#allocation2 + $0x8] sm:$0xff] %v728
        %1137 = vst [vmem:[#allocation2 + $0x10] sm:$0xff] %v729
        %1138 = vst [vmem:[#allocation2 + $0x18] sm:$0xff] %v730
        // Predicated region
        $region53: #{tpu_custom_call.1} parent=35 // pred_check
          %p1139 = pneg %p357
        $region54: #{tpu_custom_call.1} parent=35 // pred_check_branch
          %1141 = sbr.rel (%p1139) target = $region56
        $region55: #{tpu_custom_call.1} parent=35 // pred_region
          %v1142 = vld [vmem:[#allocation3] sm:$0xff]
          %v1143 = vld [vmem:[#allocation3 + $0x8] sm:$0xff]
          %v1144 = vld [vmem:[#allocation3 + $0x10] sm:$0xff]
          %v1145 = vld [vmem:[#allocation3 + $0x18] sm:$0xff]
          %v1146 = vrcp.pop %v1142
          %v1147 = vrcp.pop %v1143
          %v1148 = vrcp.pop %v1144
          %v1149 = vrcp.pop %v1145
          %v1150 = vld [vmem:[#allocation4] sm:$0xff]
          %v1151 = vld [vmem:[#allocation4 + $0x8] sm:$0xff]
          %v1152 = vld [vmem:[#allocation4 + $0x10] sm:$0xff]
          %v1153 = vld [vmem:[#allocation4 + $0x18] sm:$0xff]
          %1155 = vset.pattern.permute.xlu0 0
          %1156 = vperm.xlu0 %1155, %v1146
          %v1157 = vpop.permute.xlu0 %1156
          %1160 = vset.pattern.permute.xlu0 0
          %1161 = vperm.xlu0 %1160, %v1147
          %v1162 = vpop.permute.xlu0 %1161
          %1165 = vset.pattern.permute.xlu0 0
          %1166 = vperm.xlu0 %1165, %v1148
          %v1167 = vpop.permute.xlu0 %1166
          %1170 = vset.pattern.permute.xlu0 0
          %1171 = vperm.xlu0 %1170, %v1149
          %v1172 = vpop.permute.xlu0 %1171
          %v1174 = vmul.f32 %v1150, %v1157
          %v1175 = vmul.f32 %v1151, %v1162
          %v1176 = vmul.f32 %v1152, %v1167
          %v1177 = vmul.f32 %v1153, %v1172
          %1178 = vst.msk [vmem:[%s343] sm:$0xff] %vm394, %v1174
          %1179 = vst.msk [vmem:[%s343 + $0x8] sm:$0xff] %vm394, %v1175
          %1180 = vst.msk [vmem:[%s343 + $0x10] sm:$0xff] %vm394, %v1176
          %1181 = vst.msk [vmem:[%s343 + $0x18] sm:$0xff] %vm394, %v1177
        $region56: #{tpu_custom_call.1} parent=35 // pred_fallthru
          _
        %s1182 = sand.u32 %s165, 1
        %s1183 = scalar_lea.sflag [#allocation8], %s1182
        %s1184 = sand.u32 %s165, 1
        %s1185 = smul.addr %s1184, 32
        %s1186 = scalar_lea.vmem [#allocation12], %s1185
        // Predicated region
        $region57: #{tpu_custom_call.1} parent=35 // pred_check
          %p1187 = pneg %p175
        $region58: #{tpu_custom_call.1} parent=35 // pred_check_branch
          %1189 = sbr.rel (%p1187) target = $region60
        $region59: #{tpu_custom_call.1} parent=35 // pred_region
          %s1190 = smul.u32 4, %s29
          %s1192 = ssub.s32 512, 512
          %1193 = vsyncadd %s1183, %s1192
          %s1194 = sadd.s32 %s30, %s1190
          %s1195 = smul.addr %s1194, 128
          %s1196 = scalar_lea.hbm %s4, %s1195
          %s1197 = sshll.u32 %s1186, 4
          %s1198 = int_to_ptr.vmem [resolvable:$true] %s1197
          %1203 = dma.vmem_to_hbm [thread:$0]  %s1198, 512, %s1196, %s1183, 128, 128, 8
        $region60: #{tpu_custom_call.1} parent=35 // pred_fallthru
          _
      $region36: #{tpu_custom_call.1} parent=5 // pred_fallthru
        _
      %p1204 = scmp.le.s32.totalorder 2, %s19
      // Predicated region
      $region61: #{tpu_custom_call.1} parent=5 // pred_check
        %p1205 = pneg %p1204
      $region62: #{tpu_custom_call.1} parent=5 // pred_check_branch
        %1207 = sbr.rel (%p1205) target = $region64
      $region63: #{tpu_custom_call.1} parent=5 // pred_region
        %s1208 = ssub.s32 %s19, 2
        // Predicated region
        $region65: #{tpu_custom_call.1} parent=63 // pred_check
          %p1209 = pneg %p181
        $region66: #{tpu_custom_call.1} parent=63 // pred_check_branch
          %1211 = sbr.rel (%p1209) target = $region68
        $region67: #{tpu_custom_call.1} parent=63 // pred_region
          %s1212 = sand.u32 %s166, 1
          %s1213 = scalar_lea.sflag [#allocation8], %s1212
          %s1214 = sand.u32 %s166, 1
          %s1215 = smul.addr %s1214, 32
          %s1216 = scalar_lea.vmem [#allocation12], %s1215
          %1217 = dma.done %s1213, 512
        $region68: #{tpu_custom_call.1} parent=63 // pred_fallthru
          _
      $region64: #{tpu_custom_call.1} parent=5 // pred_fallthru
        _
    $region6: #{tpu_custom_call.1} parent=1 // loop_footer
      %s23 = sadd.s32 1, %s19
    $region7: #{tpu_custom_call.1} parent=1 // loop_footer_branch
      %18 = sbr.rel target = $region3
    $region8: #{tpu_custom_call.1} parent=1 // loop_exit
      _
    %1218 = vsyncpa [#allocation7], 1
    %s1219 = scalar_lea.sflag [#allocation7], 1
    %1220 = vsyncpa %s1219, 1
    %1221 = vsyncpa [#allocation10], 1
    %s1222 = scalar_lea.sflag [#allocation10], 1
    %1223 = vsyncpa %s1222, 1
    %1224 = vsyncpa [#allocation8], 1
    %s1225 = scalar_lea.sflag [#allocation8], 1
    %1226 = vsyncpa %s1225, 1

</llo_original>
